<compile_context>
chip_gen: v6e
topology: v6e:2x2x1
jax: 0.10.0
libtpu: 0.0.40
codegen_flags: <defaults>
</compile_context>

<pallas_src>
import numpy as np
import jax
import jax.numpy as jnp
from jax.experimental import pallas as pl
from jax.experimental.pallas import tpu as pltpu

_MAX_TILE_SUBLANES = 128       # batch tile <= 128 x 128 = 16384 elements
_SUB_ROWS = 16                 # inner compute chunk (native bf16 sublane tile)
_MAX_ANGLES_PER_CHUNK = 48     # <= 16 SU(2) blocks per feature-chunk grid step
_X_STORE_DTYPE = jnp.bfloat16  # storage dtype for x (all math stays float32)


# ------------------------------ block update ----------------------------------

def _su2_block_update(state, p0, p1, p2):
    """rho <- U rho U^H for one SU(2) block, on (r00, r11, Re r01, Im r01).

    U = [[u, v], [-conj(v), conj(u)]],
      u = cos(p0/2) e^{i(p1+p2)/2},  v = -sin(p0/2) e^{i(p1-p2)/2}
    =>  r00' = r00 + ss*(r11-r00) + 2 Re(u conj(v) r01)
        r11' = (r00 + r11) - r00'                      (trace preserved)
        r01' = u v (r11-r00) + u^2 r01 - v^2 conj(r01)
    with u conj(v) = -cs e^{i p2}, u v = -cs e^{i p1},
         u^2 = cc e^{i(p1+p2)},    v^2 = ss e^{i(p1-p2)},
         cc = (1+cos p0)/2, ss = (1-cos p0)/2, cs = sin(p0)/2.
    """
    r00, r11, r01r, r01i = state

    c0 = jnp.cos(p0); s0 = jnp.sin(p0)
    c1 = jnp.cos(p1); s1 = jnp.sin(p1)
    c2 = jnp.cos(p2); s2 = jnp.sin(p2)
    cc = 0.5 * (1.0 + c0)
    ss = 0.5 * (1.0 - c0)
    cs = 0.5 * s0

    c1c2 = c1 * c2; s1s2 = s1 * s2
    s1c2 = s1 * c2; c1s2 = c1 * s2
    er = c1c2 - s1s2   # Re e^{i(p1+p2)}
    ei = s1c2 + c1s2   # Im e^{i(p1+p2)}
    fr = c1c2 + s1s2   # Re e^{i(p1-p2)}
    fi = s1c2 - c1s2   # Im e^{i(p1-p2)}

    diff = r11 - r00
    delta = ss * diff - 2.0 * cs * (c2 * r01r - s2 * r01i)
    n00 = r00 + delta
    n11 = r11 - delta

    # r01' with pre-combined coefficients (saves ~4 VALU multiplies / block):
    cc_er = cc * er; ss_fr = ss * fr
    cc_ei = cc * ei; ss_fi = ss * fi
    a = cc_er - ss_fr
    b = cc_ei + ss_fi
    cq = cc_ei - ss_fi
    d = cc_er + ss_fr
    m = cs * diff
    n01r = a * r01r - b * r01i - m * c1
    n01i = cq * r01r + d * r01i - m * s1

    # TODO(synk): noise_channels are empty in this module config; a Kraus
    # channel acting on (n00, n11, n01r, n01i) would be applied here.
    return (n00, n11, n01r, n01i)


# ----------------------------- Pallas kernel ----------------------------------

def qlayer_chunked_kernel(w_ref, th_ref, x_ref, rho_ref, out_ref):
    """One (batch tile i, feature chunk k) grid step.

    w_ref, th_ref : SMEM (D3p,) f32 (scalar prefetch); w zero-padded past D,
                    theta zero-padded past D3 (zero-angle blocks == identity).
    x_ref         : VMEM (A, st, 128) bf16  -- feature-major, batch dense.
    rho_ref       : VMEM (4, st, 128) f32   -- [r00, r11, Re r01, Im r01].
    out_ref       : VMEM (4, st, 128) f32   -- same block index for all k, so
                    it stays resident and carries the running rho state
                    across the feature-chunk ("arbitrary") axis.
    """
    A = x_ref.shape[0]
    n_blocks = A // 3
    st = out_ref.shape[1]
    n_sub = st // _SUB_ROWS
    k = pl.program_id(1)
    base = k * A                          # global angle offset of this chunk

    @pl.when(k == 0)
    def _():
        out_ref[...] = rho_ref[...]       # initialize carried state

    def sub_body(c, carry):
        row = pl.multiple_of(c * _SUB_ROWS, _SUB_ROWS)
        sl = pl.ds(row, _SUB_ROWS)
        state = (out_ref[0, sl, :], out_ref[1, sl, :],
                 out_ref[2, sl, :], out_ref[3, sl, :])
        for blk in range(n_blocks):       # fully unrolled; <= 16 blocks / chunk
            d0 = base + 3 * blk
            p0 = th_ref[d0] + w_ref[d0] * x_ref[3 * blk, sl, :].astype(jnp.float32)
            p1 = th_ref[d0 + 1] + w_ref[d0 + 1] * x_ref[3 * blk + 1, sl, :].astype(jnp.float32)
            p2 = th_ref[d0 + 2] + w_ref[d0 + 2] * x_ref[3 * blk + 2, sl, :].astype(jnp.float32)
            state = _su2_block_update(state, p0, p1, p2)
        out_ref[0, sl, :] = state[0]
        out_ref[1, sl, :] = state[1]
        out_ref[2, sl, :] = state[2]
        out_ref[3, sl, :] = state[3]
        return carry

    jax.lax.fori_loop(0, n_sub, sub_body, 0)


# ------------------------------- wrapper --------------------------------------

@jax.jit
def qlayer_chunked_forward(rho, x, w, theta):
    """rho: (B, 2, 2) complex64 Hermitian density matrices,
       x: (B, D) float32, w: (D,) float32, theta: (D3,) float32."""
    B, D = x.shape
    D3 = theta.shape[0]

    # ---- batch tiling: dense (sublane, lane) layout, 16-row granularity ------
    grp = _SUB_ROWS * 128                               # 2048 elements / group
    g_full = -(-B // grp)
    g_per_tile_max = _MAX_TILE_SUBLANES // _SUB_ROWS
    n_tiles = -(-g_full // g_per_tile_max)
    if g_full >= 2:
        n_tiles = max(n_tiles, 2)                       # both v7x TCs busy
    gt = -(-g_full // n_tiles)
    st = gt * _SUB_ROWS                                 # sublanes per tile
    sp = n_tiles * st
    bp = sp * 128                                       # padded batch

    # ---- feature (angle) chunking: VMEM footprint constant in D --------------
    n_fchunks = -(-D3 // _MAX_ANGLES_PER_CHUNK)
    A = -(-D3 // (3 * n_fchunks)) * 3                   # angles per chunk
    D3p = n_fchunks * A                                 # zero pad -> identity blocks

    # ---- pack inputs (all fused under jit; x written to HBM as bf16) ---------
    x_packed = (jnp.zeros((D3p, bp), _X_STORE_DTYPE)
                .at[:D, :B].set(x.T.astype(_X_STORE_DTYPE))
                .reshape(D3p, sp, 128))
    w_pad = jnp.zeros((D3p,), jnp.float32).at[:D].set(w.astype(jnp.float32))
    th_pad = jnp.zeros((D3p,), jnp.float32).at[:D3].set(theta.astype(jnp.float32))

    r01 = rho[:, 0, 1]
    rho_rows = jnp.stack([jnp.real(rho[:, 0, 0]).astype(jnp.float32),
                          jnp.real(rho[:, 1, 1]).astype(jnp.float32),
                          jnp.real(r01).astype(jnp.float32),
                          jnp.imag(r01).astype(jnp.float32)], axis=0)   # (4, B)
    rho_packed = (jnp.zeros((4, bp), jnp.float32)
                  .at[:, :B].set(rho_rows)
                  .reshape(4, sp, 128))

    out = pl.pallas_call(
        qlayer_chunked_kernel,
        out_shape=jax.ShapeDtypeStruct((4, sp, 128), jnp.float32),
        grid_spec=pltpu.PrefetchScalarGridSpec(
            num_scalar_prefetch=2,                      # w, theta -> SMEM
            grid=(n_tiles, n_fchunks),                  # reduction axis last
            in_specs=[
                pl.BlockSpec((A, st, 128), lambda i, k, w_s, t_s: (k, i, 0)),
                pl.BlockSpec((4, st, 128), lambda i, k, w_s, t_s: (0, i, 0)),
            ],
            out_specs=pl.BlockSpec((4, st, 128), lambda i, k, w_s, t_s: (0, i, 0)),
        ),
        compiler_params=pltpu.CompilerParams(
            dimension_semantics=("parallel", "arbitrary")),
    )(w_pad, th_pad, x_packed, rho_packed)

    # ---- unpack back to (B, 2, 2) complex (Hermitian reconstruction) ---------
    out_flat = out.reshape(4, bp)[:, :B]
    o00, o11, o01r, o01i = out_flat[0], out_flat[1], out_flat[2], out_flat[3]
    zero = jnp.zeros_like(o00)
    out_re = jnp.stack([jnp.stack([o00, o01r], -1),
                        jnp.stack([o01r, o11], -1)], -2)        # (B, 2, 2)
    out_im = jnp.stack([jnp.stack([zero, o01i], -1),
                        jnp.stack([-o01i, zero], -1)], -2)
    return (out_re + 1j * out_im).astype(jnp.complex64)


# ---------------------------- pure-JAX reference -------------------------------

def qlayer_chunked_reference(rho, x, w, theta):
    B, D = x.shape
    D3 = theta.shape[0]
    phi = jnp.tile(theta, (B, 1))
    phi = phi.at[:, :D].add(w[None, :] * x)
    for i in range(D3 // 3):
        p0, p1, p2 = phi[:, 3 * i], phi[:, 3 * i + 1], phi[:, 3 * i + 2]
        U = jnp.zeros((B, 2, 2), jnp.complex64)
        U = U.at[:, 0, 0].set(jnp.cos(p0 / 2) * jnp.exp(1j * (p1 + p2) / 2))
        U = U.at[:, 0, 1].set(-jnp.sin(p0 / 2) * jnp.exp(1j * (p1 - p2) / 2))
        U = U.at[:, 1, 0].set(jnp.sin(p0 / 2) * jnp.exp(-1j * (p1 - p2) / 2))
        U = U.at[:, 1, 1].set(jnp.cos(p0 / 2) * jnp.exp(-1j * (p1 + p2) / 2))
        rho = jnp.einsum('bim,bmn,bjn->bij', U, rho, jnp.conj(U))
    return rho


_reference_jit = jax.jit(qlayer_chunked_reference)


# ----------------------------------- main --------------------------------------

def _make_inputs(key, B, D):
    D3 = ((D - 1) // 3 + 1) * 3
    k_w, k_x, k_vr, k_vi = jax.random.split(key, 4)
    # matches nn.init.normal_(std=sqrt(2/3)) for w, zeros for theta
    w = jax.random.normal(k_w, (D,), jnp.float32) * np.sqrt(2.0 / 3.0)
    theta = jnp.zeros((D3,), jnp.float32)
    x = jax.random.normal(k_x, (B, D), jnp.float32)
    # valid density matrices from random pure states
    v = (jax.random.normal(k_vr, (B, 2), jnp.float32)
         + 1j * jax.random.normal(k_vi, (B, 2), jnp.float32)).astype(jnp.complex64)
    v = v / jnp.linalg.norm(v, axis=1, keepdims=True)
    rho0 = v[:, :, None] * jnp.conj(v)[:, None, :]              # (B, 2, 2)
    return rho0, x, w, theta


def _check(rho0, x, w, theta, rtol, atol):
    out = jax.block_until_ready(qlayer_chunked_forward(rho0, x, w, theta))
    # The kernel stores x as bf16 (math in f32); validate against a reference
    # fed the identically-quantized x so the comparison isolates kernel math.
    x_q = x.astype(jnp.bfloat16).astype(jnp.float32)
    ref = jax.block_until_ready(_reference_jit(rho0, x_q, w, theta))
    np.testing.assert_allclose(np.asarray(out), np.asarray(ref),
                               rtol=rtol, atol=atol)


if __name__ == "__main__":
    key = jax.random.PRNGKey(0)
    k1, k2 = jax.random.split(key)

    # Small shape: B=8, D=4 (D3=6 -> 2 blocks; single tile, single feature chunk).
    rho0, x, w, theta = _make_inputs(k1, B=8, D=4)
    _check(rho0, x, w, theta, rtol=2e-4, atol=5e-5)

    # Moderate shape: exercises forced >=2 "parallel" batch tiles, the
    # 16-sublane inner loop (st=32), the feature-chunked "arbitrary" grid axis
    # (D3=102 -> 3 chunks of 36 angles incl. identity padding) and batch padding.
    rho0, x, w, theta = _make_inputs(k2, B=4100, D=100)
    _check(rho0, x, w, theta, rtol=1e-3, atol=3e-4)

    print("KERNEL_OK")
</pallas_src>

<mosaic_0001>
module attributes {stable_mosaic.version = 11 : i64} {
  func.func @qlayer_chunked_kernel(%arg0: i32, %arg1: i32, %arg2: memref<6xf32, #tpu.memory_space<smem>>, %arg3: memref<6xf32, #tpu.memory_space<smem>>, %arg4: memref<6x16x128xbf16, #tpu.memory_space<vmem>>, %arg5: memref<4x16x128xf32, #tpu.memory_space<vmem>>, %arg6: memref<4x16x128xf32, #tpu.memory_space<vmem>>) attributes {dimension_semantics = [#tpu.dimension_semantics<parallel>, #tpu.dimension_semantics<arbitrary>], iteration_bounds = array<i64: 1, 1>, scalar_prefetch = 2 : i64, scratch_operands = 0 : i64, tpu.core_type = #tpu.core_type<tc>, window_params = [{transform_indices = @transform_0, window_bounds = array<i64: 6, 16, 128>}, {transform_indices = @transform_1, window_bounds = array<i64: 4, 16, 128>}, {transform_indices = @transform_2, window_bounds = array<i64: 4, 16, 128>}]} {
    %c6_i32 = arith.constant 6 : i32
    %0 = arith.muli %arg1, %c6_i32 : i32
    %c0_i32 = arith.constant 0 : i32
    %1 = arith.cmpi eq, %arg1, %c0_i32 : i32
    %2 = arith.extui %1 : i1 to i32
    %c0_i32_0 = arith.constant 0 : i32
    %3 = arith.cmpi ne, %2, %c0_i32_0 : i32
    scf.if %3 {
      %c0_43 = arith.constant 0 : index
      %c0_44 = arith.constant 0 : index
      %c0_45 = arith.constant 0 : index
      %224 = vector.load %arg5[%c0_43, %c0_44, %c0_45] : memref<4x16x128xf32, #tpu.memory_space<vmem>>, vector<4x16x128xf32>
      %c0_46 = arith.constant 0 : index
      %c0_47 = arith.constant 0 : index
      %c0_48 = arith.constant 0 : index
      %225 = vector.load %arg6[%c0_46, %c0_47, %c0_48] : memref<4x16x128xf32, #tpu.memory_space<vmem>>, vector<4x16x128xf32>
      tpu.vector_store %arg6[%c0_46, %c0_47, %c0_48], %224 {strides = array<i32>} : memref<4x16x128xf32, #tpu.memory_space<vmem>>, vector<4x16x128xf32>,
    } else {
    }
    %c0_i32_1 = arith.constant 0 : i32
    %c16_i32 = arith.constant 16 : i32
    %4 = arith.muli %c0_i32_1, %c16_i32 : i32
    %5 = tpu.assume_multiple %4, 16 : i32
    %c0 = arith.constant 0 : index
    %6 = arith.index_cast %5 : i32 to index
    %c0_2 = arith.constant 0 : index
    %7 = vector.load %arg6[%c0, %6, %c0_2] : memref<4x16x128xf32, #tpu.memory_space<vmem>>, vector<1x16x128xf32>
    %8 = vector.shape_cast %7 : vector<1x16x128xf32> to vector<16x128xf32>
    %c1 = arith.constant 1 : index
    %9 = arith.index_cast %5 : i32 to index
    %c0_3 = arith.constant 0 : index
    %10 = vector.load %arg6[%c1, %9, %c0_3] : memref<4x16x128xf32, #tpu.memory_space<vmem>>, vector<1x16x128xf32>
    %11 = vector.shape_cast %10 : vector<1x16x128xf32> to vector<16x128xf32>
    %c2 = arith.constant 2 : index
    %12 = arith.index_cast %5 : i32 to index
    %c0_4 = arith.constant 0 : index
    %13 = vector.load %arg6[%c2, %12, %c0_4] : memref<4x16x128xf32, #tpu.memory_space<vmem>>, vector<1x16x128xf32>
    %14 = vector.shape_cast %13 : vector<1x16x128xf32> to vector<16x128xf32>
    %c3 = arith.constant 3 : index
    %15 = arith.index_cast %5 : i32 to index
    %c0_5 = arith.constant 0 : index
    %16 = vector.load %arg6[%c3, %15, %c0_5] : memref<4x16x128xf32, #tpu.memory_space<vmem>>, vector<1x16x128xf32>
    %17 = vector.shape_cast %16 : vector<1x16x128xf32> to vector<16x128xf32>
    %c0_i32_6 = arith.constant 0 : i32
    %18 = arith.addi %0, %c0_i32_6 : i32
    %19 = arith.index_cast %18 : i32 to index
    %20 = memref.load %arg3[%19] : memref<6xf32, #tpu.memory_space<smem>>
    %21 = arith.index_cast %18 : i32 to index
    %22 = memref.load %arg2[%21] : memref<6xf32, #tpu.memory_space<smem>>
    %c0_7 = arith.constant 0 : index
    %23 = arith.index_cast %5 : i32 to index
    %c0_8 = arith.constant 0 : index
    %24 = vector.load %arg4[%c0_7, %23, %c0_8] : memref<6x16x128xbf16, #tpu.memory_space<vmem>>, vector<1x16x128xbf16>
    %25 = vector.shape_cast %24 : vector<1x16x128xbf16> to vector<16x128xbf16>
    %26 = arith.extf %25 : vector<16x128xbf16> to vector<16x128xf32>
    %27 = vector.broadcast %22 : f32 to vector<16x128xf32>
    %28 = arith.mulf %27, %26 : vector<16x128xf32>
    %29 = vector.broadcast %20 : f32 to vector<16x128xf32>
    %30 = arith.addf %29, %28 : vector<16x128xf32>
    %c1_i32 = arith.constant 1 : i32
    %31 = arith.addi %18, %c1_i32 : i32
    %32 = arith.index_cast %31 : i32 to index
    %33 = memref.load %arg3[%32] : memref<6xf32, #tpu.memory_space<smem>>
    %c1_i32_9 = arith.constant 1 : i32
    %34 = arith.addi %18, %c1_i32_9 : i32
    %35 = arith.index_cast %34 : i32 to index
    %36 = memref.load %arg2[%35] : memref<6xf32, #tpu.memory_space<smem>>
    %c1_10 = arith.constant 1 : index
    %37 = arith.index_cast %5 : i32 to index
    %c0_11 = arith.constant 0 : index
    %38 = vector.load %arg4[%c1_10, %37, %c0_11] : memref<6x16x128xbf16, #tpu.memory_space<vmem>>, vector<1x16x128xbf16>
    %39 = vector.shape_cast %38 : vector<1x16x128xbf16> to vector<16x128xbf16>
    %40 = arith.extf %39 : vector<16x128xbf16> to vector<16x128xf32>
    %41 = vector.broadcast %36 : f32 to vector<16x128xf32>
    %42 = arith.mulf %41, %40 : vector<16x128xf32>
    %43 = vector.broadcast %33 : f32 to vector<16x128xf32>
    %44 = arith.addf %43, %42 : vector<16x128xf32>
    %c2_i32 = arith.constant 2 : i32
    %45 = arith.addi %18, %c2_i32 : i32
    %46 = arith.index_cast %45 : i32 to index
    %47 = memref.load %arg3[%46] : memref<6xf32, #tpu.memory_space<smem>>
    %c2_i32_12 = arith.constant 2 : i32
    %48 = arith.addi %18, %c2_i32_12 : i32
    %49 = arith.index_cast %48 : i32 to index
    %50 = memref.load %arg2[%49] : memref<6xf32, #tpu.memory_space<smem>>
    %c2_13 = arith.constant 2 : index
    %51 = arith.index_cast %5 : i32 to index
    %c0_14 = arith.constant 0 : index
    %52 = vector.load %arg4[%c2_13, %51, %c0_14] : memref<6x16x128xbf16, #tpu.memory_space<vmem>>, vector<1x16x128xbf16>
    %53 = vector.shape_cast %52 : vector<1x16x128xbf16> to vector<16x128xbf16>
    %54 = arith.extf %53 : vector<16x128xbf16> to vector<16x128xf32>
    %55 = vector.broadcast %50 : f32 to vector<16x128xf32>
    %56 = arith.mulf %55, %54 : vector<16x128xf32>
    %57 = vector.broadcast %47 : f32 to vector<16x128xf32>
    %58 = arith.addf %57, %56 : vector<16x128xf32>
    %59 = math.cos %30 : vector<16x128xf32>
    %60 = math.sin %30 : vector<16x128xf32>
    %61 = math.cos %44 : vector<16x128xf32>
    %62 = math.sin %44 : vector<16x128xf32>
    %63 = math.cos %58 : vector<16x128xf32>
    %64 = math.sin %58 : vector<16x128xf32>
    %cst = arith.constant 1.000000e+00 : f32
    %65 = vector.broadcast %cst : f32 to vector<16x128xf32>
    %66 = arith.addf %65, %59 : vector<16x128xf32>
    %cst_15 = arith.constant 5.000000e-01 : f32
    %67 = vector.broadcast %cst_15 : f32 to vector<16x128xf32>
    %68 = arith.mulf %67, %66 : vector<16x128xf32>
    %cst_16 = arith.constant 1.000000e+00 : f32
    %69 = vector.broadcast %cst_16 : f32 to vector<16x128xf32>
    %70 = arith.subf %69, %59 : vector<16x128xf32>
    %cst_17 = arith.constant 5.000000e-01 : f32
    %71 = vector.broadcast %cst_17 : f32 to vector<16x128xf32>
    %72 = arith.mulf %71, %70 : vector<16x128xf32>
    %cst_18 = arith.constant 5.000000e-01 : f32
    %73 = vector.broadcast %cst_18 : f32 to vector<16x128xf32>
    %74 = arith.mulf %73, %60 : vector<16x128xf32>
    %75 = arith.mulf %61, %63 : vector<16x128xf32>
    %76 = arith.mulf %62, %64 : vector<16x128xf32>
    %77 = arith.mulf %62, %63 : vector<16x128xf32>
    %78 = arith.mulf %61, %64 : vector<16x128xf32>
    %79 = arith.subf %75, %76 : vector<16x128xf32>
    %80 = arith.addf %77, %78 : vector<16x128xf32>
    %81 = arith.addf %75, %76 : vector<16x128xf32>
    %82 = arith.subf %77, %78 : vector<16x128xf32>
    %83 = arith.subf %11, %8 : vector<16x128xf32>
    %84 = arith.mulf %72, %83 : vector<16x128xf32>
    %cst_19 = arith.constant 2.000000e+00 : f32
    %85 = vector.broadcast %cst_19 : f32 to vector<16x128xf32>
    %86 = arith.mulf %85, %74 : vector<16x128xf32>
    %87 = arith.mulf %63, %14 : vector<16x128xf32>
    %88 = arith.mulf %64, %17 : vector<16x128xf32>
    %89 = arith.subf %87, %88 : vector<16x128xf32>
    %90 = arith.mulf %86, %89 : vector<16x128xf32>
    %91 = arith.subf %84, %90 : vector<16x128xf32>
    %92 = arith.addf %8, %91 : vector<16x128xf32>
    %93 = arith.subf %11, %91 : vector<16x128xf32>
    %94 = arith.mulf %68, %79 : vector<16x128xf32>
    %95 = arith.mulf %72, %81 : vector<16x128xf32>
    %96 = arith.mulf %68, %80 : vector<16x128xf32>
    %97 = arith.mulf %72, %82 : vector<16x128xf32>
    %98 = arith.subf %94, %95 : vector<16x128xf32>
    %99 = arith.addf %96, %97 : vector<16x128xf32>
    %100 = arith.subf %96, %97 : vector<16x128xf32>
    %101 = arith.addf %94, %95 : vector<16x128xf32>
    %102 = arith.mulf %74, %83 : vector<16x128xf32>
    %103 = arith.mulf %98, %14 : vector<16x128xf32>
    %104 = arith.mulf %99, %17 : vector<16x128xf32>
    %105 = arith.subf %103, %104 : vector<16x128xf32>
    %106 = arith.mulf %102, %61 : vector<16x128xf32>
    %107 = arith.subf %105, %106 : vector<16x128xf32>
    %108 = arith.mulf %100, %14 : vector<16x128xf32>
    %109 = arith.mulf %101, %17 : vector<16x128xf32>
    %110 = arith.addf %108, %109 : vector<16x128xf32>
    %111 = arith.mulf %102, %62 : vector<16x128xf32>
    %112 = arith.subf %110, %111 : vector<16x128xf32>
    %c3_i32 = arith.constant 3 : i32
    %113 = arith.addi %0, %c3_i32 : i32
    %114 = arith.index_cast %113 : i32 to index
    %115 = memref.load %arg3[%114] : memref<6xf32, #tpu.memory_space<smem>>
    %116 = arith.index_cast %113 : i32 to index
    %117 = memref.load %arg2[%116] : memref<6xf32, #tpu.memory_space<smem>>
    %c3_20 = arith.constant 3 : index
    %118 = arith.index_cast %5 : i32 to index
    %c0_21 = arith.constant 0 : index
    %119 = vector.load %arg4[%c3_20, %118, %c0_21] : memref<6x16x128xbf16, #tpu.memory_space<vmem>>, vector<1x16x128xbf16>
    %120 = vector.shape_cast %119 : vector<1x16x128xbf16> to vector<16x128xbf16>
    %121 = arith.extf %120 : vector<16x128xbf16> to vector<16x128xf32>
    %122 = vector.broadcast %117 : f32 to vector<16x128xf32>
    %123 = arith.mulf %122, %121 : vector<16x128xf32>
    %124 = vector.broadcast %115 : f32 to vector<16x128xf32>
    %125 = arith.addf %124, %123 : vector<16x128xf32>
    %c1_i32_22 = arith.constant 1 : i32
    %126 = arith.addi %113, %c1_i32_22 : i32
    %127 = arith.index_cast %126 : i32 to index
    %128 = memref.load %arg3[%127] : memref<6xf32, #tpu.memory_space<smem>>
    %c1_i32_23 = arith.constant 1 : i32
    %129 = arith.addi %113, %c1_i32_23 : i32
    %130 = arith.index_cast %129 : i32 to index
    %131 = memref.load %arg2[%130] : memref<6xf32, #tpu.memory_space<smem>>
    %c4 = arith.constant 4 : index
    %132 = arith.index_cast %5 : i32 to index
    %c0_24 = arith.constant 0 : index
    %133 = vector.load %arg4[%c4, %132, %c0_24] : memref<6x16x128xbf16, #tpu.memory_space<vmem>>, vector<1x16x128xbf16>
    %134 = vector.shape_cast %133 : vector<1x16x128xbf16> to vector<16x128xbf16>
    %135 = arith.extf %134 : vector<16x128xbf16> to vector<16x128xf32>
    %136 = vector.broadcast %131 : f32 to vector<16x128xf32>
    %137 = arith.mulf %136, %135 : vector<16x128xf32>
    %138 = vector.broadcast %128 : f32 to vector<16x128xf32>
    %139 = arith.addf %138, %137 : vector<16x128xf32>
    %c2_i32_25 = arith.constant 2 : i32
    %140 = arith.addi %113, %c2_i32_25 : i32
    %141 = arith.index_cast %140 : i32 to index
    %142 = memref.load %arg3[%141] : memref<6xf32, #tpu.memory_space<smem>>
    %c2_i32_26 = arith.constant 2 : i32
    %143 = arith.addi %113, %c2_i32_26 : i32
    %144 = arith.index_cast %143 : i32 to index
    %145 = memref.load %arg2[%144] : memref<6xf32, #tpu.memory_space<smem>>
    %c5 = arith.constant 5 : index
    %146 = arith.index_cast %5 : i32 to index
    %c0_27 = arith.constant 0 : index
    %147 = vector.load %arg4[%c5, %146, %c0_27] : memref<6x16x128xbf16, #tpu.memory_space<vmem>>, vector<1x16x128xbf16>
    %148 = vector.shape_cast %147 : vector<1x16x128xbf16> to vector<16x128xbf16>
    %149 = arith.extf %148 : vector<16x128xbf16> to vector<16x128xf32>
    %150 = vector.broadcast %145 : f32 to vector<16x128xf32>
    %151 = arith.mulf %150, %149 : vector<16x128xf32>
    %152 = vector.broadcast %142 : f32 to vector<16x128xf32>
    %153 = arith.addf %152, %151 : vector<16x128xf32>
    %154 = math.cos %125 : vector<16x128xf32>
    %155 = math.sin %125 : vector<16x128xf32>
    %156 = math.cos %139 : vector<16x128xf32>
    %157 = math.sin %139 : vector<16x128xf32>
    %158 = math.cos %153 : vector<16x128xf32>
    %159 = math.sin %153 : vector<16x128xf32>
    %cst_28 = arith.constant 1.000000e+00 : f32
    %160 = vector.broadcast %cst_28 : f32 to vector<16x128xf32>
    %161 = arith.addf %160, %154 : vector<16x128xf32>
    %cst_29 = arith.constant 5.000000e-01 : f32
    %162 = vector.broadcast %cst_29 : f32 to vector<16x128xf32>
    %163 = arith.mulf %162, %161 : vector<16x128xf32>
    %cst_30 = arith.constant 1.000000e+00 : f32
    %164 = vector.broadcast %cst_30 : f32 to vector<16x128xf32>
    %165 = arith.subf %164, %154 : vector<16x128xf32>
    %cst_31 = arith.constant 5.000000e-01 : f32
    %166 = vector.broadcast %cst_31 : f32 to vector<16x128xf32>
    %167 = arith.mulf %166, %165 : vector<16x128xf32>
    %cst_32 = arith.constant 5.000000e-01 : f32
    %168 = vector.broadcast %cst_32 : f32 to vector<16x128xf32>
    %169 = arith.mulf %168, %155 : vector<16x128xf32>
    %170 = arith.mulf %156, %158 : vector<16x128xf32>
    %171 = arith.mulf %157, %159 : vector<16x128xf32>
    %172 = arith.mulf %157, %158 : vector<16x128xf32>
    %173 = arith.mulf %156, %159 : vector<16x128xf32>
    %174 = arith.subf %170, %171 : vector<16x128xf32>
    %175 = arith.addf %172, %173 : vector<16x128xf32>
    %176 = arith.addf %170, %171 : vector<16x128xf32>
    %177 = arith.subf %172, %173 : vector<16x128xf32>
    %178 = arith.subf %93, %92 : vector<16x128xf32>
    %179 = arith.mulf %167, %178 : vector<16x128xf32>
    %cst_33 = arith.constant 2.000000e+00 : f32
    %180 = vector.broadcast %cst_33 : f32 to vector<16x128xf32>
    %181 = arith.mulf %180, %169 : vector<16x128xf32>
    %182 = arith.mulf %158, %107 : vector<16x128xf32>
    %183 = arith.mulf %159, %112 : vector<16x128xf32>
    %184 = arith.subf %182, %183 : vector<16x128xf32>
    %185 = arith.mulf %181, %184 : vector<16x128xf32>
    %186 = arith.subf %179, %185 : vector<16x128xf32>
    %187 = arith.addf %92, %186 : vector<16x128xf32>
    %188 = arith.subf %93, %186 : vector<16x128xf32>
    %189 = arith.mulf %163, %174 : vector<16x128xf32>
    %190 = arith.mulf %167, %176 : vector<16x128xf32>
    %191 = arith.mulf %163, %175 : vector<16x128xf32>
    %192 = arith.mulf %167, %177 : vector<16x128xf32>
    %193 = arith.subf %189, %190 : vector<16x128xf32>
    %194 = arith.addf %191, %192 : vector<16x128xf32>
    %195 = arith.subf %191, %192 : vector<16x128xf32>
    %196 = arith.addf %189, %190 : vector<16x128xf32>
    %197 = arith.mulf %169, %178 : vector<16x128xf32>
    %198 = arith.mulf %193, %107 : vector<16x128xf32>
    %199 = arith.mulf %194, %112 : vector<16x128xf32>
    %200 = arith.subf %198, %199 : vector<16x128xf32>
    %201 = arith.mulf %197, %156 : vector<16x128xf32>
    %202 = arith.subf %200, %201 : vector<16x128xf32>
    %203 = arith.mulf %195, %107 : vector<16x128xf32>
    %204 = arith.mulf %196, %112 : vector<16x128xf32>
    %205 = arith.addf %203, %204 : vector<16x128xf32>
    %206 = arith.mulf %197, %157 : vector<16x128xf32>
    %207 = arith.subf %205, %206 : vector<16x128xf32>
    %c0_34 = arith.constant 0 : index
    %208 = arith.index_cast %5 : i32 to index
    %c0_35 = arith.constant 0 : index
    %209 = vector.load %arg6[%c0_34, %208, %c0_35] : memref<4x16x128xf32, #tpu.memory_space<vmem>>, vector<1x16x128xf32>
    %210 = vector.shape_cast %209 : vector<1x16x128xf32> to vector<16x128xf32>
    %211 = vector.shape_cast %187 : vector<16x128xf32> to vector<1x16x128xf32>
    tpu.vector_store %arg6[%c0_34, %208, %c0_35], %211 {strides = array<i32>} : memref<4x16x128xf32, #tpu.memory_space<vmem>>, vector<1x16x128xf32>,
    %c1_36 = arith.constant 1 : index
    %212 = arith.index_cast %5 : i32 to index
    %c0_37 = arith.constant 0 : index
    %213 = vector.load %arg6[%c1_36, %212, %c0_37] : memref<4x16x128xf32, #tpu.memory_space<vmem>>, vector<1x16x128xf32>
    %214 = vector.shape_cast %213 : vector<1x16x128xf32> to vector<16x128xf32>
    %215 = vector.shape_cast %188 : vector<16x128xf32> to vector<1x16x128xf32>
    tpu.vector_store %arg6[%c1_36, %212, %c0_37], %215 {strides = array<i32>} : memref<4x16x128xf32, #tpu.memory_space<vmem>>, vector<1x16x128xf32>,
    %c2_38 = arith.constant 2 : index
    %216 = arith.index_cast %5 : i32 to index
    %c0_39 = arith.constant 0 : index
    %217 = vector.load %arg6[%c2_38, %216, %c0_39] : memref<4x16x128xf32, #tpu.memory_space<vmem>>, vector<1x16x128xf32>
    %218 = vector.shape_cast %217 : vector<1x16x128xf32> to vector<16x128xf32>
    %219 = vector.shape_cast %202 : vector<16x128xf32> to vector<1x16x128xf32>
    tpu.vector_store %arg6[%c2_38, %216, %c0_39], %219 {strides = array<i32>} : memref<4x16x128xf32, #tpu.memory_space<vmem>>, vector<1x16x128xf32>,
    %c3_40 = arith.constant 3 : index
    %220 = arith.index_cast %5 : i32 to index
    %c0_41 = arith.constant 0 : index
    %221 = vector.load %arg6[%c3_40, %220, %c0_41] : memref<4x16x128xf32, #tpu.memory_space<vmem>>, vector<1x16x128xf32>
    %222 = vector.shape_cast %221 : vector<1x16x128xf32> to vector<16x128xf32>
    %223 = vector.shape_cast %207 : vector<16x128xf32> to vector<1x16x128xf32>
    tpu.vector_store %arg6[%c3_40, %220, %c0_41], %223 {strides = array<i32>} : memref<4x16x128xf32, #tpu.memory_space<vmem>>, vector<1x16x128xf32>,
    %c1_i32_42 = arith.constant 1 : i32
    return
  }
  func.func @transform_0(%arg0: i32, %arg1: i32, %arg2: memref<6xf32, #tpu.memory_space<smem>>, %arg3: memref<6xf32, #tpu.memory_space<smem>>) -> (i32, i32, i32) {
    %c0_i32 = arith.constant 0 : i32
    %c0_i32_0 = arith.constant 0 : i32
    return %arg1, %arg0, %c0_i32 : i32, i32, i32
  }
  func.func @transform_1(%arg0: i32, %arg1: i32, %arg2: memref<6xf32, #tpu.memory_space<smem>>, %arg3: memref<6xf32, #tpu.memory_space<smem>>) -> (i32, i32, i32) {
    %c0_i32 = arith.constant 0 : i32
    %c0_i32_0 = arith.constant 0 : i32
    %c0_i32_1 = arith.constant 0 : i32
    return %c0_i32, %arg0, %c0_i32_0 : i32, i32, i32
  }
  func.func @transform_2(%arg0: i32, %arg1: i32, %arg2: memref<6xf32, #tpu.memory_space<smem>>, %arg3: memref<6xf32, #tpu.memory_space<smem>>) -> (i32, i32, i32) {
    %c0_i32 = arith.constant 0 : i32
    %c0_i32_0 = arith.constant 0 : i32
    %c0_i32_1 = arith.constant 0 : i32
    return %c0_i32, %arg0, %c0_i32_0 : i32, i32, i32
  }
}

</mosaic_0001>

<llo_original>
// kernel: custom-call.1
$region0: #{custom-call.1}
  %s0 = inlined_call_operand.hbm [shape: c64[8,2,2], index: 0, kind: input, shape index: {}]
  %s1 = inlined_call_operand.vmem [shape: f32[8,2,2], index: 1, kind: output, shape index: {}]
  %s2 = scalar_lea.hbm %s0, 64
  $region1: #{custom-call.1} parent=0
    #allocation0 [shape = 's32[1]{0}', space=sflag, size = 0x4, scoped, tag = 'scoped memory for custom-call.1']
    %3 = vsyncpa [#allocation0], 0
    %s4 = sshll.u32 %s1, 4
    %s5 = int_to_ptr.vmem [resolvable:$true] %s4
    %7 = dma.hbm_to_vmem [thread:$0]  %s2, 64, %s5, [#allocation0]
    %8 = dma.done [#allocation0], 64
    %9 = vsyncpa [#allocation0], 1

// kernel: custom-call
$region0: #{custom-call}
  %s0 = inlined_call_operand.hbm [shape: c64[8,2,2], index: 0, kind: input, shape index: {}]
  %s1 = inlined_call_operand.vmem [shape: f32[8,2,2], index: 1, kind: output, shape index: {}]
  $region1: #{custom-call} parent=0
    #allocation0 [shape = 's32[1]{0}', space=sflag, size = 0x4, scoped, tag = 'scoped memory for custom-call']
    %2 = vsyncpa [#allocation0], 0
    %s3 = sshll.u32 %s1, 4
    %s4 = int_to_ptr.vmem [resolvable:$true] %s3
    %6 = dma.hbm_to_vmem [thread:$0]  %s0, 64, %s4, [#allocation0]
    %7 = dma.done [#allocation0], 64
    %8 = vsyncpa [#allocation0], 1

// kernel: custom-call.2
$region0: #{custom-call.2}
  %s0 = inlined_call_operand.vmem [shape: f32[8,2,2], index: 0, kind: input, shape index: {}]
  %s1 = inlined_call_operand.vmem [shape: f32[8,2,2], index: 1, kind: input, shape index: {}]
  %s2 = inlined_call_operand.hbm [shape: c64[8,2,2], index: 2, kind: output, shape index: {}]
  %s3 = scalar_lea.hbm %s2, 64
  $region1: #{custom-call.2} parent=0
    #allocation0 [shape = 's32[1]{0}', space=sflag, size = 0x4, scoped, tag = 'scoped memory for custom-call.2']
    %4 = vsyncpa [#allocation0], 0
    %s5 = sshll.u32 %s0, 4
    %s6 = int_to_ptr.vmem [resolvable:$true] %s5
    %8 = dma.vmem_to_hbm [thread:$0]  %s6, 64, %s2, [#allocation0]
    %9 = dma.done [#allocation0], 64
    %10 = vsyncpa [#allocation0], 1
  $region2: #{custom-call.2} parent=0
    #allocation1 [shape = 's32[1]{0}', space=sflag, size = 0x4, scoped, tag = 'scoped memory for custom-call.2']
    %11 = vsyncpa [#allocation1], 0
    %s12 = sshll.u32 %s1, 4
    %s13 = int_to_ptr.vmem [resolvable:$true] %s12
    %15 = dma.vmem_to_hbm [thread:$0]  %s13, 64, %s3, [#allocation1]
    %16 = dma.done [#allocation1], 64
    %17 = vsyncpa [#allocation1], 1

// kernel: qlayer_chunked_forward.1
$region0: #{qlayer_chunked_forward.1}
  #allocation0 [shape = 'u32[]', space=smem, size = 0x4, offset = 0x4, fixed_abs, tag = 'smem constant byte address 0x4 - core index']
  #allocation1 [shape = 'u32[144,128]{1,0:T(1,128)}', space=vmem, size = 0x12000, scoped, tag = 'internal scratch']
  #allocation2 [shape = 's32[1]{0}', space=sflag, size = 0x4, scoped, tag = 'scoped memory for qlayer_chunked_forward.1']
  #allocation3 [shape = 'u8[512]{0}', space=smem, size = 0x200, scoped, tag = 'prefetched SMEM operand 0']
  #allocation4 [shape = 'u8[512]{0}', space=smem, size = 0x200, scoped, tag = 'prefetched SMEM operand 1']
  %s0 = inlined_call_operand.vmem [shape: f32[6], index: 0, kind: input, shape index: {}]
  %s1 = inlined_call_operand.vmem [shape: f32[6], index: 1, kind: input, shape index: {}]
  %s2 = inlined_call_operand.vmem [shape: bf16[6,16,128], index: 2, kind: input, shape index: {}]
  %s3 = inlined_call_operand.vmem [shape: f32[4,16,128], index: 3, kind: input, shape index: {}]
  %s4 = inlined_call_operand.vmem [shape: f32[4,16,128], index: 4, kind: output, shape index: {}]
  %s5 = sld [smem:[#allocation0]]
  $region22: #{qlayer_chunked_forward.1} parent=0
    _
  %s7 = ssub.s32 1, %s5
  %s8 = scalar_select 0, %s7, %s5
  %s9 = sshll.u32 %s0, 4
  %s10 = int_to_ptr.vmem [resolvable:$true] %s9
  %12 = dma.vmem_to_smem %s10, 16, [#allocation3], [#allocation2]
  %s13 = sshll.u32 %s1, 4
  %s14 = int_to_ptr.vmem [resolvable:$true] %s13
  %16 = dma.vmem_to_smem %s14, 16, [#allocation4], [#allocation2]
  %17 = dma.done [#allocation2], 32
  %18 = sfence
  // Predicated region
  $region2: #{qlayer_chunked_forward.1} parent=0 // pred_check
    _
  $region3: #{qlayer_chunked_forward.1} parent=0 // pred_check_branch
    %20 = sbr.rel (0) target = $region5
  $region4: #{qlayer_chunked_forward.1} parent=0 // pred_region
    _
  $region5: #{qlayer_chunked_forward.1} parent=0 // pred_fallthru
    _
  // Predicated region
  $region6: #{qlayer_chunked_forward.1} parent=0 // pred_check
    _
  $region7: #{qlayer_chunked_forward.1} parent=0 // pred_check_branch
    %22 = sbr.rel (0) target = $region9
  $region8: #{qlayer_chunked_forward.1} parent=0 // pred_region
    _
  $region9: #{qlayer_chunked_forward.1} parent=0 // pred_fallthru
    _
  %s23 = smul.u32 0, 6
  %p24 = scmp.eq.s32.totalorder 0, 0
  // Predicated region
  $region10: #{qlayer_chunked_forward.1} parent=0 // pred_check
    %p25 = pneg %p24
  $region11: #{qlayer_chunked_forward.1} parent=0 // pred_check_branch
    %27 = sbr.rel (%p25) target = $region13
  $region12: #{qlayer_chunked_forward.1} parent=0 // pred_region
    %v28 = vld [vmem:[%s3] sm:$0xff]
    %v29 = vld [vmem:[%s3 + $0x8] sm:$0xff]
    %v30 = vld [vmem:[%s3 + $0x10] sm:$0xff]
    %v31 = vld [vmem:[%s3 + $0x18] sm:$0xff]
    %v32 = vld [vmem:[%s3 + $0x20] sm:$0xff]
    %v33 = vld [vmem:[%s3 + $0x28] sm:$0xff]
    %v34 = vld [vmem:[%s3 + $0x30] sm:$0xff]
    %v35 = vld [vmem:[%s3 + $0x38] sm:$0xff]
    %36 = vst [vmem:[%s4] sm:$0xff] %v28
    %37 = vst [vmem:[%s4 + $0x8] sm:$0xff] %v29
    %38 = vst [vmem:[%s4 + $0x10] sm:$0xff] %v30
    %39 = vst [vmem:[%s4 + $0x18] sm:$0xff] %v31
    %40 = vst [vmem:[%s4 + $0x20] sm:$0xff] %v32
    %41 = vst [vmem:[%s4 + $0x28] sm:$0xff] %v33
    %42 = vst [vmem:[%s4 + $0x30] sm:$0xff] %v34
    %43 = vst [vmem:[%s4 + $0x38] sm:$0xff] %v35
  $region13: #{qlayer_chunked_forward.1} parent=0 // pred_fallthru
    _
  %v44 = vld [vmem:[%s4] sm:$0xff]
  %v45 = vld [vmem:[%s4 + $0x8] sm:$0xff]
  %s46 = sadd.s32 0, 16
  %s47 = scalar_lea.vmem %s4, %s46
  %v48 = vld [vmem:[%s47] sm:$0xff]
  %v49 = vld [vmem:[%s47 + $0x8] sm:$0xff]
  %s50 = sadd.s32 0, 32
  %s51 = scalar_lea.vmem %s4, %s50
  %v52 = vld [vmem:[%s51] sm:$0xff]
  %v53 = vld [vmem:[%s51 + $0x8] sm:$0xff]
  %s54 = sadd.s32 0, 48
  %s55 = scalar_lea.vmem %s4, %s54
  %v56 = vld [vmem:[%s55] sm:$0xff]
  %v57 = vld [vmem:[%s55 + $0x8] sm:$0xff]
  %s58 = sld [smem:[#allocation4 + %s23]]
  %s59 = sld [smem:[#allocation3 + %s23]]
  %v60 = vld [vmem:[%s2] sm:$0xf]
  %v61 = vld [vmem:[%s2 + $0x4] sm:$0xf]
  %v62 = vunpack.c.l.bf16 %v60
  %v63 = vunpack.c.l.bf16 %v61
  %v64 = vstv %s59
  %v65 = vmul.f32 %v64, %v62
  %v66 = vmul.f32 %v64, %v63
  %v67 = vstv %s58
  %v68 = vadd.f32 %v67, %v65
  %v69 = vadd.f32 %v67, %v66
  %s70 = sadd.s32 %s23, 1
  %s71 = sld [smem:[#allocation4 + %s70]]
  %s72 = sld [smem:[#allocation3 + %s70]]
  %s73 = sadd.s32 0, 2
  %s74 = smul.addr %s73, 4
  %s75 = scalar_lea.vmem %s2, %s74
  %v76 = vld [vmem:[%s75] sm:$0xf]
  %v77 = vld [vmem:[%s75 + $0x4] sm:$0xf]
  %v78 = vunpack.c.l.bf16 %v76
  %v79 = vunpack.c.l.bf16 %v77
  %v80 = vstv %s72
  %v81 = vmul.f32 %v80, %v78
  %v82 = vmul.f32 %v80, %v79
  %v83 = vstv %s71
  %v84 = vadd.f32 %v83, %v81
  %v85 = vadd.f32 %v83, %v82
  %s86 = sadd.s32 %s23, 2
  %s87 = sld [smem:[#allocation4 + %s86]]
  %s88 = sld [smem:[#allocation3 + %s86]]
  %s89 = sadd.s32 0, 4
  %s90 = smul.addr %s89, 4
  %s91 = scalar_lea.vmem %s2, %s90
  %v92 = vld [vmem:[%s91] sm:$0xf]
  %v93 = vld [vmem:[%s91 + $0x4] sm:$0xf]
  %v94 = vunpack.c.l.bf16 %v92
  %v95 = vunpack.c.l.bf16 %v93
  %v96 = vstv %s88
  %v97 = vmul.f32 %v96, %v94
  %v98 = vmul.f32 %v96, %v95
  %v99 = vstv %s87
  %v100 = vadd.f32 %v99, %v97
  %v101 = vadd.f32 %v99, %v98
  %v102 = vand.u32 2147483647, %v68
  %vm103 = vcmp.le.f32.partialorder %v102, 0.7853982
  %vm104 = vcmp.lt.s32.totalorder %v68, 0
  %v105 = vand.u32 %v68, 2139095040
  %v106 = vshrl.u32 %v105, 23
  %v107 = vsub.s32 %v106, 127
  %v108 = vand.u32 2147483647, %v68
  %v109 = vand.u32 %v108, 8388607
  %v110 = vor.u32 %v109, 8388608
  %v111 = vsub.s32 0, %v110
  %v112 = vadd.s32 %v107, 1
  %vm113 = vcmp.gt.s32.totalorder %v112, 0
  %v114 = vsel %vm113, %v112, 0
  %v115 = vshrl.u32 %v114, 5
  %v116 = vand.u32 %v114, 31
  %v117 = vsub.s32 32, %v116
  %v118 = vshrl.u32 683565275, %v117
  %v119 = vshll.u32 683565275, %v116
  %v120 = vshrl.u32 2475754826, %v117
  %v121 = vor.u32 %v119, %v120
  %v122 = vshll.u32 2475754826, %v116
  %v123 = vshrl.u32 2131351028, %v117
  %v124 = vor.u32 %v122, %v123
  %v125 = vshll.u32 2131351028, %v116
  %v126 = vshrl.u32 2102212464, %v117
  %v127 = vor.u32 %v125, %v126
  %v128 = vshll.u32 2102212464, %v116
  %v129 = vshrl.u32 920167782, %v117
  %v130 = vor.u32 %v128, %v129
  %v131 = vshll.u32 920167782, %v116
  %v132 = vshrl.u32 1326507024, %v117
  %v133 = vor.u32 %v131, %v132
  %vm134 = vcmp.lt.s32.totalorder %v115, 1
  %vm135 = vcmp.lt.s32.totalorder %v115, 2
  %vm136 = vcmp.lt.s32.totalorder %v115, 3
  %vm137 = vcmp.lt.s32.totalorder %v115, 4
  %v138 = vsel %vm134, %v118, %v121
  %v139 = vsel %vm137, %v127, 2102212464
  %v140 = vsel %vm136, %v124, %v139
  %v141 = vsel %vm135, %v138, %v140
  %v142 = vsel %vm134, %v121, %v124
  %v143 = vsel %vm137, %v130, 920167782
  %v144 = vsel %vm136, %v127, %v143
  %v145 = vsel %vm135, %v142, %v144
  %v146 = vsel %vm134, %v124, %v127
  %v147 = vsel %vm137, %v133, 1326507024
  %v148 = vsel %vm136, %v130, %v147
  %v149 = vsel %vm135, %v146, %v148
  %v150 = vshll.u32 %v110, 8
  %v151 = vmul.u32.u64.compose %v150, %v149
  %v152 = vextract.low.u32 %v151
  %v153 = vextract.high.u32 %v151
  %v154 = vmul.u32.u64.compose %v150, %v145
  %v155 = vextract.low.u32 %v154
  %v156 = vextract.high.u32 %v154
  %v157 = vmul.u32 %v150, %v141
  %v158 = vadd.s32 %v153, %v155
  %vm159 = vc.u32 %v153, %v155
  %v160 = vadd.s32 %v156, 1
  %v161 = vsel %vm159, %v160, %v156
  %v162 = vadd.s32 %v157, %v161
  %v163 = vadd.s32 %v162, 536870912
  %v164 = vshrl.u32 %v163, 30
  %v165 = vshll.u32 %v164, 30
  %v166 = vsub.s32 %v162, %v165
  %vm167 = vcmp.lt.s32.totalorder %v166, 0
  %v168 = vsub.s32 0, %v166
  %v169 = vsel %vm167, %v168, %v166
  %v170 = vclz %v169
  %v171 = vsub.s32 %v170, 2
  %vm172 = vcmp.gt.s32.totalorder 0, %v171
  %v173 = vsel %vm172, 0, %v171
  %v174 = vsub.s32 32, %v173
  %v175 = vshll.u32 %v166, %v173
  %v176 = vshrl.u32 %v158, %v174
  %v177 = vor.u32 %v175, %v176
  %v178 = vsub.s32 4294967266, %v173
  %v179 = vadd.s32 %v178, 127
  %v180 = vshll.u32 %v179, 23
  %v181 = vor.u32 4788187, %v180
  %v182 = vand.u32 2147483647, %v181
  %v184 = vcvt.s32.f32 %v177
  %v185 = vmul.f32 %v184, %v182
  %v186 = vxor.u32 %v185, 2147483648
  %v187 = vsel %vm104, %v186, %v185
  %v188 = vsub.s32 4, %v164
  %v189 = vsel %vm104, %v188, %v164
  %v190 = vsel %vm103, %v68, %v187
  %v191 = vsel %vm103, 0, %v189
  %v192 = vcosq.f32.pop %v190
  %v193 = vsinq.f32.pop %v190
  %vm194 = vweird.f32 %v68
  %v195 = vand.u32 %v191, 3
  %vm196 = vcmp.lt.s32.totalorder %v195, 2
  %vm197 = vcmp.eq.s32.totalorder %v195, 0
  %v198 = vxor.u32 %v193, 2147483648
  %v199 = vsel %vm197, %v192, %v198
  %vm200 = vcmp.eq.s32.totalorder %v195, 2
  %v201 = vxor.u32 %v192, 2147483648
  %v202 = vsel %vm200, %v201, %v193
  %v203 = vsel %vm196, %v199, %v202
  %v204 = vsel %vm194, nan, %v203
  %v205 = vand.u32 2147483647, %v69
  %vm206 = vcmp.le.f32.partialorder %v205, 0.7853982
  %vm207 = vcmp.lt.s32.totalorder %v69, 0
  %v208 = vand.u32 %v69, 2139095040
  %v209 = vshrl.u32 %v208, 23
  %v210 = vsub.s32 %v209, 127
  %v211 = vand.u32 2147483647, %v69
  %v212 = vand.u32 %v211, 8388607
  %v213 = vor.u32 %v212, 8388608
  %v214 = vsub.s32 0, %v213
  %v215 = vadd.s32 %v210, 1
  %vm216 = vcmp.gt.s32.totalorder %v215, 0
  %v217 = vsel %vm216, %v215, 0
  %v218 = vshrl.u32 %v217, 5
  %v219 = vand.u32 %v217, 31
  %v220 = vsub.s32 32, %v219
  %v221 = vshrl.u32 683565275, %v220
  %v222 = vshll.u32 683565275, %v219
  %v223 = vshrl.u32 2475754826, %v220
  %v224 = vor.u32 %v222, %v223
  %v225 = vshll.u32 2475754826, %v219
  %v226 = vshrl.u32 2131351028, %v220
  %v227 = vor.u32 %v225, %v226
  %v228 = vshll.u32 2131351028, %v219
  %v229 = vshrl.u32 2102212464, %v220
  %v230 = vor.u32 %v228, %v229
  %v231 = vshll.u32 2102212464, %v219
  %v232 = vshrl.u32 920167782, %v220
  %v233 = vor.u32 %v231, %v232
  %v234 = vshll.u32 920167782, %v219
  %v235 = vshrl.u32 1326507024, %v220
  %v236 = vor.u32 %v234, %v235
  %vm237 = vcmp.lt.s32.totalorder %v218, 1
  %vm238 = vcmp.lt.s32.totalorder %v218, 2
  %vm239 = vcmp.lt.s32.totalorder %v218, 3
  %vm240 = vcmp.lt.s32.totalorder %v218, 4
  %v241 = vsel %vm237, %v221, %v224
  %v242 = vsel %vm240, %v230, 2102212464
  %v243 = vsel %vm239, %v227, %v242
  %v244 = vsel %vm238, %v241, %v243
  %v245 = vsel %vm237, %v224, %v227
  %v246 = vsel %vm240, %v233, 920167782
  %v247 = vsel %vm239, %v230, %v246
  %v248 = vsel %vm238, %v245, %v247
  %v249 = vsel %vm237, %v227, %v230
  %v250 = vsel %vm240, %v236, 1326507024
  %v251 = vsel %vm239, %v233, %v250
  %v252 = vsel %vm238, %v249, %v251
  %v253 = vshll.u32 %v213, 8
  %v254 = vmul.u32.u64.compose %v253, %v252
  %v255 = vextract.low.u32 %v254
  %v256 = vextract.high.u32 %v254
  %v257 = vmul.u32.u64.compose %v253, %v248
  %v258 = vextract.low.u32 %v257
  %v259 = vextract.high.u32 %v257
  %v260 = vmul.u32 %v253, %v244
  %v261 = vadd.s32 %v256, %v258
  %vm262 = vc.u32 %v256, %v258
  %v263 = vadd.s32 %v259, 1
  %v264 = vsel %vm262, %v263, %v259
  %v265 = vadd.s32 %v260, %v264
  %v266 = vadd.s32 %v265, 536870912
  %v267 = vshrl.u32 %v266, 30
  %v268 = vshll.u32 %v267, 30
  %v269 = vsub.s32 %v265, %v268
  %vm270 = vcmp.lt.s32.totalorder %v269, 0
  %v271 = vsub.s32 0, %v269
  %v272 = vsel %vm270, %v271, %v269
  %v273 = vclz %v272
  %v274 = vsub.s32 %v273, 2
  %vm275 = vcmp.gt.s32.totalorder 0, %v274
  %v276 = vsel %vm275, 0, %v274
  %v277 = vsub.s32 32, %v276
  %v278 = vshll.u32 %v269, %v276
  %v279 = vshrl.u32 %v261, %v277
  %v280 = vor.u32 %v278, %v279
  %v281 = vsub.s32 4294967266, %v276
  %v282 = vadd.s32 %v281, 127
  %v283 = vshll.u32 %v282, 23
  %v284 = vor.u32 4788187, %v283
  %v285 = vand.u32 2147483647, %v284
  %v287 = vcvt.s32.f32 %v280
  %v288 = vmul.f32 %v287, %v285
  %v289 = vxor.u32 %v288, 2147483648
  %v290 = vsel %vm207, %v289, %v288
  %v291 = vsub.s32 4, %v267
  %v292 = vsel %vm207, %v291, %v267
  %v293 = vsel %vm206, %v69, %v290
  %v294 = vsel %vm206, 0, %v292
  %v295 = vcosq.f32.pop %v293
  %v296 = vsinq.f32.pop %v293
  %vm297 = vweird.f32 %v69
  %v298 = vand.u32 %v294, 3
  %vm299 = vcmp.lt.s32.totalorder %v298, 2
  %vm300 = vcmp.eq.s32.totalorder %v298, 0
  %v301 = vxor.u32 %v296, 2147483648
  %v302 = vsel %vm300, %v295, %v301
  %vm303 = vcmp.eq.s32.totalorder %v298, 2
  %v304 = vxor.u32 %v295, 2147483648
  %v305 = vsel %vm303, %v304, %v296
  %v306 = vsel %vm299, %v302, %v305
  %v307 = vsel %vm297, nan, %v306
  %v308 = vand.u32 2147483647, %v68
  %vm309 = vcmp.le.f32.partialorder %v308, 0.7853982
  %vm310 = vcmp.lt.s32.totalorder %v68, 0
  %v311 = vand.u32 %v68, 2139095040
  %v312 = vshrl.u32 %v311, 23
  %v313 = vsub.s32 %v312, 127
  %v314 = vand.u32 2147483647, %v68
  %v315 = vand.u32 %v314, 8388607
  %v316 = vor.u32 %v315, 8388608
  %v317 = vsub.s32 0, %v316
  %v318 = vadd.s32 %v313, 1
  %vm319 = vcmp.gt.s32.totalorder %v318, 0
  %v320 = vsel %vm319, %v318, 0
  %v321 = vshrl.u32 %v320, 5
  %v322 = vand.u32 %v320, 31
  %v323 = vsub.s32 32, %v322
  %v324 = vshrl.u32 683565275, %v323
  %v325 = vshll.u32 683565275, %v322
  %v326 = vshrl.u32 2475754826, %v323
  %v327 = vor.u32 %v325, %v326
  %v328 = vshll.u32 2475754826, %v322
  %v329 = vshrl.u32 2131351028, %v323
  %v330 = vor.u32 %v328, %v329
  %v331 = vshll.u32 2131351028, %v322
  %v332 = vshrl.u32 2102212464, %v323
  %v333 = vor.u32 %v331, %v332
  %v334 = vshll.u32 2102212464, %v322
  %v335 = vshrl.u32 920167782, %v323
  %v336 = vor.u32 %v334, %v335
  %v337 = vshll.u32 920167782, %v322
  %v338 = vshrl.u32 1326507024, %v323
  %v339 = vor.u32 %v337, %v338
  %vm340 = vcmp.lt.s32.totalorder %v321, 1
  %vm341 = vcmp.lt.s32.totalorder %v321, 2
  %vm342 = vcmp.lt.s32.totalorder %v321, 3
  %vm343 = vcmp.lt.s32.totalorder %v321, 4
  %v344 = vsel %vm340, %v324, %v327
  %v345 = vsel %vm343, %v333, 2102212464
  %v346 = vsel %vm342, %v330, %v345
  %v347 = vsel %vm341, %v344, %v346
  %v348 = vsel %vm340, %v327, %v330
  %v349 = vsel %vm343, %v336, 920167782
  %v350 = vsel %vm342, %v333, %v349
  %v351 = vsel %vm341, %v348, %v350
  %v352 = vsel %vm340, %v330, %v333
  %v353 = vsel %vm343, %v339, 1326507024
  %v354 = vsel %vm342, %v336, %v353
  %v355 = vsel %vm341, %v352, %v354
  %v356 = vshll.u32 %v316, 8
  %v357 = vmul.u32.u64.compose %v356, %v355
  %v358 = vextract.low.u32 %v357
  %v359 = vextract.high.u32 %v357
  %v360 = vmul.u32.u64.compose %v356, %v351
  %v361 = vextract.low.u32 %v360
  %v362 = vextract.high.u32 %v360
  %v363 = vmul.u32 %v356, %v347
  %v364 = vadd.s32 %v359, %v361
  %vm365 = vc.u32 %v359, %v361
  %v366 = vadd.s32 %v362, 1
  %v367 = vsel %vm365, %v366, %v362
  %v368 = vadd.s32 %v363, %v367
  %v369 = vadd.s32 %v368, 536870912
  %v370 = vshrl.u32 %v369, 30
  %v371 = vshll.u32 %v370, 30
  %v372 = vsub.s32 %v368, %v371
  %vm373 = vcmp.lt.s32.totalorder %v372, 0
  %v374 = vsub.s32 0, %v372
  %v375 = vsel %vm373, %v374, %v372
  %v376 = vclz %v375
  %v377 = vsub.s32 %v376, 2
  %vm378 = vcmp.gt.s32.totalorder 0, %v377
  %v379 = vsel %vm378, 0, %v377
  %v380 = vsub.s32 32, %v379
  %v381 = vshll.u32 %v372, %v379
  %v382 = vshrl.u32 %v364, %v380
  %v383 = vor.u32 %v381, %v382
  %v384 = vsub.s32 4294967266, %v379
  %v385 = vadd.s32 %v384, 127
  %v386 = vshll.u32 %v385, 23
  %v387 = vor.u32 4788187, %v386
  %v388 = vand.u32 2147483647, %v387
  %v390 = vcvt.s32.f32 %v383
  %v391 = vmul.f32 %v390, %v388
  %v392 = vxor.u32 %v391, 2147483648
  %v393 = vsel %vm310, %v392, %v391
  %v394 = vsub.s32 4, %v370
  %v395 = vsel %vm310, %v394, %v370
  %v396 = vsel %vm309, %v68, %v393
  %v397 = vsel %vm309, 0, %v395
  %v398 = vcosq.f32.pop %v396
  %v399 = vsinq.f32.pop %v396
  %vm400 = vweird.f32 %v68
  %v401 = vadd.s32 %v397, 3
  %v402 = vand.u32 %v401, 3
  %vm403 = vcmp.lt.s32.totalorder %v402, 2
  %vm404 = vcmp.eq.s32.totalorder %v402, 0
  %v405 = vxor.u32 %v399, 2147483648
  %v406 = vsel %vm404, %v398, %v405
  %vm407 = vcmp.eq.s32.totalorder %v402, 2
  %v408 = vxor.u32 %v398, 2147483648
  %v409 = vsel %vm407, %v408, %v399
  %v410 = vsel %vm403, %v406, %v409
  %v411 = vsel %vm400, nan, %v410
  %v412 = vand.u32 2147483647, %v69
  %vm413 = vcmp.le.f32.partialorder %v412, 0.7853982
  %vm414 = vcmp.lt.s32.totalorder %v69, 0
  %v415 = vand.u32 %v69, 2139095040
  %v416 = vshrl.u32 %v415, 23
  %v417 = vsub.s32 %v416, 127
  %v418 = vand.u32 2147483647, %v69
  %v419 = vand.u32 %v418, 8388607
  %v420 = vor.u32 %v419, 8388608
  %v421 = vsub.s32 0, %v420
  %v422 = vadd.s32 %v417, 1
  %vm423 = vcmp.gt.s32.totalorder %v422, 0
  %v424 = vsel %vm423, %v422, 0
  %v425 = vshrl.u32 %v424, 5
  %v426 = vand.u32 %v424, 31
  %v427 = vsub.s32 32, %v426
  %v428 = vshrl.u32 683565275, %v427
  %v429 = vshll.u32 683565275, %v426
  %v430 = vshrl.u32 2475754826, %v427
  %v431 = vor.u32 %v429, %v430
  %v432 = vshll.u32 2475754826, %v426
  %v433 = vshrl.u32 2131351028, %v427
  %v434 = vor.u32 %v432, %v433
  %v435 = vshll.u32 2131351028, %v426
  %v436 = vshrl.u32 2102212464, %v427
  %v437 = vor.u32 %v435, %v436
  %v438 = vshll.u32 2102212464, %v426
  %v439 = vshrl.u32 920167782, %v427
  %v440 = vor.u32 %v438, %v439
  %v441 = vshll.u32 920167782, %v426
  %v442 = vshrl.u32 1326507024, %v427
  %v443 = vor.u32 %v441, %v442
  %vm444 = vcmp.lt.s32.totalorder %v425, 1
  %vm445 = vcmp.lt.s32.totalorder %v425, 2
  %vm446 = vcmp.lt.s32.totalorder %v425, 3
  %vm447 = vcmp.lt.s32.totalorder %v425, 4
  %v448 = vsel %vm444, %v428, %v431
  %v449 = vsel %vm447, %v437, 2102212464
  %v450 = vsel %vm446, %v434, %v449
  %v451 = vsel %vm445, %v448, %v450
  %v452 = vsel %vm444, %v431, %v434
  %v453 = vsel %vm447, %v440, 920167782
  %v454 = vsel %vm446, %v437, %v453
  %v455 = vsel %vm445, %v452, %v454
  %v456 = vsel %vm444, %v434, %v437
  %v457 = vsel %vm447, %v443, 1326507024
  %v458 = vsel %vm446, %v440, %v457
  %v459 = vsel %vm445, %v456, %v458
  %v460 = vshll.u32 %v420, 8
  %v461 = vmul.u32.u64.compose %v460, %v459
  %v462 = vextract.low.u32 %v461
  %v463 = vextract.high.u32 %v461
  %v464 = vmul.u32.u64.compose %v460, %v455
  %v465 = vextract.low.u32 %v464
  %v466 = vextract.high.u32 %v464
  %v467 = vmul.u32 %v460, %v451
  %v468 = vadd.s32 %v463, %v465
  %vm469 = vc.u32 %v463, %v465
  %v470 = vadd.s32 %v466, 1
  %v471 = vsel %vm469, %v470, %v466
  %v472 = vadd.s32 %v467, %v471
  %v473 = vadd.s32 %v472, 536870912
  %v474 = vshrl.u32 %v473, 30
  %v475 = vshll.u32 %v474, 30
  %v476 = vsub.s32 %v472, %v475
  %vm477 = vcmp.lt.s32.totalorder %v476, 0
  %v478 = vsub.s32 0, %v476
  %v479 = vsel %vm477, %v478, %v476
  %v480 = vclz %v479
  %v481 = vsub.s32 %v480, 2
  %vm482 = vcmp.gt.s32.totalorder 0, %v481
  %v483 = vsel %vm482, 0, %v481
  %v484 = vsub.s32 32, %v483
  %v485 = vshll.u32 %v476, %v483
  %v486 = vshrl.u32 %v468, %v484
  %v487 = vor.u32 %v485, %v486
  %v488 = vsub.s32 4294967266, %v483
  %v489 = vadd.s32 %v488, 127
  %v490 = vshll.u32 %v489, 23
  %v491 = vor.u32 4788187, %v490
  %v492 = vand.u32 2147483647, %v491
  %v494 = vcvt.s32.f32 %v487
  %v495 = vmul.f32 %v494, %v492
  %v496 = vxor.u32 %v495, 2147483648
  %v497 = vsel %vm414, %v496, %v495
  %v498 = vsub.s32 4, %v474
  %v499 = vsel %vm414, %v498, %v474
  %v500 = vsel %vm413, %v69, %v497
  %v501 = vsel %vm413, 0, %v499
  %v502 = vcosq.f32.pop %v500
  %v503 = vsinq.f32.pop %v500
  %vm504 = vweird.f32 %v69
  %v505 = vadd.s32 %v501, 3
  %v506 = vand.u32 %v505, 3
  %vm507 = vcmp.lt.s32.totalorder %v506, 2
  %vm508 = vcmp.eq.s32.totalorder %v506, 0
  %v509 = vxor.u32 %v503, 2147483648
  %v510 = vsel %vm508, %v502, %v509
  %vm511 = vcmp.eq.s32.totalorder %v506, 2
  %v512 = vxor.u32 %v502, 2147483648
  %v513 = vsel %vm511, %v512, %v503
  %v514 = vsel %vm507, %v510, %v513
  %v515 = vsel %vm504, nan, %v514
  %v516 = vand.u32 2147483647, %v84
  %vm517 = vcmp.le.f32.partialorder %v516, 0.7853982
  %vm518 = vcmp.lt.s32.totalorder %v84, 0
  %v519 = vand.u32 %v84, 2139095040
  %v520 = vshrl.u32 %v519, 23
  %v521 = vsub.s32 %v520, 127
  %v522 = vand.u32 2147483647, %v84
  %v523 = vand.u32 %v522, 8388607
  %v524 = vor.u32 %v523, 8388608
  %v525 = vsub.s32 0, %v524
  %v526 = vadd.s32 %v521, 1
  %vm527 = vcmp.gt.s32.totalorder %v526, 0
  %v528 = vsel %vm527, %v526, 0
  %v529 = vshrl.u32 %v528, 5
  %v530 = vand.u32 %v528, 31
  %v531 = vsub.s32 32, %v530
  %v532 = vshrl.u32 683565275, %v531
  %v533 = vshll.u32 683565275, %v530
  %v534 = vshrl.u32 2475754826, %v531
  %v535 = vor.u32 %v533, %v534
  %v536 = vshll.u32 2475754826, %v530
  %v537 = vshrl.u32 2131351028, %v531
  %v538 = vor.u32 %v536, %v537
  %v539 = vshll.u32 2131351028, %v530
  %v540 = vshrl.u32 2102212464, %v531
  %v541 = vor.u32 %v539, %v540
  %v542 = vshll.u32 2102212464, %v530
  %v543 = vshrl.u32 920167782, %v531
  %v544 = vor.u32 %v542, %v543
  %v545 = vshll.u32 920167782, %v530
  %v546 = vshrl.u32 1326507024, %v531
  %v547 = vor.u32 %v545, %v546
  %vm548 = vcmp.lt.s32.totalorder %v529, 1
  %vm549 = vcmp.lt.s32.totalorder %v529, 2
  %vm550 = vcmp.lt.s32.totalorder %v529, 3
  %vm551 = vcmp.lt.s32.totalorder %v529, 4
  %v552 = vsel %vm548, %v532, %v535
  %v553 = vsel %vm551, %v541, 2102212464
  %v554 = vsel %vm550, %v538, %v553
  %v555 = vsel %vm549, %v552, %v554
  %v556 = vsel %vm548, %v535, %v538
  %v557 = vsel %vm551, %v544, 920167782
  %v558 = vsel %vm550, %v541, %v557
  %v559 = vsel %vm549, %v556, %v558
  %v560 = vsel %vm548, %v538, %v541
  %v561 = vsel %vm551, %v547, 1326507024
  %v562 = vsel %vm550, %v544, %v561
  %v563 = vsel %vm549, %v560, %v562
  %v564 = vshll.u32 %v524, 8
  %v565 = vmul.u32.u64.compose %v564, %v563
  %v566 = vextract.low.u32 %v565
  %v567 = vextract.high.u32 %v565
  %v568 = vmul.u32.u64.compose %v564, %v559
  %v569 = vextract.low.u32 %v568
  %v570 = vextract.high.u32 %v568
  %v571 = vmul.u32 %v564, %v555
  %v572 = vadd.s32 %v567, %v569
  %vm573 = vc.u32 %v567, %v569
  %v574 = vadd.s32 %v570, 1
  %v575 = vsel %vm573, %v574, %v570
  %v576 = vadd.s32 %v571, %v575
  %v577 = vadd.s32 %v576, 536870912
  %v578 = vshrl.u32 %v577, 30
  %v579 = vshll.u32 %v578, 30
  %v580 = vsub.s32 %v576, %v579
  %vm581 = vcmp.lt.s32.totalorder %v580, 0
  %v582 = vsub.s32 0, %v580
  %v583 = vsel %vm581, %v582, %v580
  %v584 = vclz %v583
  %v585 = vsub.s32 %v584, 2
  %vm586 = vcmp.gt.s32.totalorder 0, %v585
  %v587 = vsel %vm586, 0, %v585
  %v588 = vsub.s32 32, %v587
  %v589 = vshll.u32 %v580, %v587
  %v590 = vshrl.u32 %v572, %v588
  %v591 = vor.u32 %v589, %v590
  %v592 = vsub.s32 4294967266, %v587
  %v593 = vadd.s32 %v592, 127
  %v594 = vshll.u32 %v593, 23
  %v595 = vor.u32 4788187, %v594
  %v596 = vand.u32 2147483647, %v595
  %v598 = vcvt.s32.f32 %v591
  %v599 = vmul.f32 %v598, %v596
  %v600 = vxor.u32 %v599, 2147483648
  %v601 = vsel %vm518, %v600, %v599
  %v602 = vsub.s32 4, %v578
  %v603 = vsel %vm518, %v602, %v578
  %v604 = vsel %vm517, %v84, %v601
  %v605 = vsel %vm517, 0, %v603
  %v606 = vcosq.f32.pop %v604
  %v607 = vsinq.f32.pop %v604
  %vm608 = vweird.f32 %v84
  %v609 = vand.u32 %v605, 3
  %vm610 = vcmp.lt.s32.totalorder %v609, 2
  %vm611 = vcmp.eq.s32.totalorder %v609, 0
  %v612 = vxor.u32 %v607, 2147483648
  %v613 = vsel %vm611, %v606, %v612
  %vm614 = vcmp.eq.s32.totalorder %v609, 2
  %v615 = vxor.u32 %v606, 2147483648
  %v616 = vsel %vm614, %v615, %v607
  %v617 = vsel %vm610, %v613, %v616
  %v618 = vsel %vm608, nan, %v617
  %v619 = vand.u32 2147483647, %v85
  %vm620 = vcmp.le.f32.partialorder %v619, 0.7853982
  %vm621 = vcmp.lt.s32.totalorder %v85, 0
  %v622 = vand.u32 %v85, 2139095040
  %v623 = vshrl.u32 %v622, 23
  %v624 = vsub.s32 %v623, 127
  %v625 = vand.u32 2147483647, %v85
  %v626 = vand.u32 %v625, 8388607
  %v627 = vor.u32 %v626, 8388608
  %v628 = vsub.s32 0, %v627
  %v629 = vadd.s32 %v624, 1
  %vm630 = vcmp.gt.s32.totalorder %v629, 0
  %v631 = vsel %vm630, %v629, 0
  %v632 = vshrl.u32 %v631, 5
  %v633 = vand.u32 %v631, 31
  %v634 = vsub.s32 32, %v633
  %v635 = vshrl.u32 683565275, %v634
  %v636 = vshll.u32 683565275, %v633
  %v637 = vshrl.u32 2475754826, %v634
  %v638 = vor.u32 %v636, %v637
  %v639 = vshll.u32 2475754826, %v633
  %v640 = vshrl.u32 2131351028, %v634
  %v641 = vor.u32 %v639, %v640
  %v642 = vshll.u32 2131351028, %v633
  %v643 = vshrl.u32 2102212464, %v634
  %v644 = vor.u32 %v642, %v643
  %v645 = vshll.u32 2102212464, %v633
  %v646 = vshrl.u32 920167782, %v634
  %v647 = vor.u32 %v645, %v646
  %v648 = vshll.u32 920167782, %v633
  %v649 = vshrl.u32 1326507024, %v634
  %v650 = vor.u32 %v648, %v649
  %vm651 = vcmp.lt.s32.totalorder %v632, 1
  %vm652 = vcmp.lt.s32.totalorder %v632, 2
  %vm653 = vcmp.lt.s32.totalorder %v632, 3
  %vm654 = vcmp.lt.s32.totalorder %v632, 4
  %v655 = vsel %vm651, %v635, %v638
  %v656 = vsel %vm654, %v644, 2102212464
  %v657 = vsel %vm653, %v641, %v656
  %v658 = vsel %vm652, %v655, %v657
  %v659 = vsel %vm651, %v638, %v641
  %v660 = vsel %vm654, %v647, 920167782
  %v661 = vsel %vm653, %v644, %v660
  %v662 = vsel %vm652, %v659, %v661
  %v663 = vsel %vm651, %v641, %v644
  %v664 = vsel %vm654, %v650, 1326507024
  %v665 = vsel %vm653, %v647, %v664
  %v666 = vsel %vm652, %v663, %v665
  %v667 = vshll.u32 %v627, 8
  %v668 = vmul.u32.u64.compose %v667, %v666
  %v669 = vextract.low.u32 %v668
  %v670 = vextract.high.u32 %v668
  %v671 = vmul.u32.u64.compose %v667, %v662
  %v672 = vextract.low.u32 %v671
  %v673 = vextract.high.u32 %v671
  %v674 = vmul.u32 %v667, %v658
  %v675 = vadd.s32 %v670, %v672
  %vm676 = vc.u32 %v670, %v672
  %v677 = vadd.s32 %v673, 1
  %v678 = vsel %vm676, %v677, %v673
  %v679 = vadd.s32 %v674, %v678
  %v680 = vadd.s32 %v679, 536870912
  %v681 = vshrl.u32 %v680, 30
  %v682 = vshll.u32 %v681, 30
  %v683 = vsub.s32 %v679, %v682
  %vm684 = vcmp.lt.s32.totalorder %v683, 0
  %v685 = vsub.s32 0, %v683
  %v686 = vsel %vm684, %v685, %v683
  %v687 = vclz %v686
  %v688 = vsub.s32 %v687, 2
  %vm689 = vcmp.gt.s32.totalorder 0, %v688
  %v690 = vsel %vm689, 0, %v688
  %v691 = vsub.s32 32, %v690
  %v692 = vshll.u32 %v683, %v690
  %v693 = vshrl.u32 %v675, %v691
  %v694 = vor.u32 %v692, %v693
  %v695 = vsub.s32 4294967266, %v690
  %v696 = vadd.s32 %v695, 127
  %v697 = vshll.u32 %v696, 23
  %v698 = vor.u32 4788187, %v697
  %v699 = vand.u32 2147483647, %v698
  %v701 = vcvt.s32.f32 %v694
  %v702 = vmul.f32 %v701, %v699
  %v703 = vxor.u32 %v702, 2147483648
  %v704 = vsel %vm621, %v703, %v702
  %v705 = vsub.s32 4, %v681
  %v706 = vsel %vm621, %v705, %v681
  %v707 = vsel %vm620, %v85, %v704
  %v708 = vsel %vm620, 0, %v706
  %v709 = vcosq.f32.pop %v707
  %v710 = vsinq.f32.pop %v707
  %vm711 = vweird.f32 %v85
  %v712 = vand.u32 %v708, 3
  %vm713 = vcmp.lt.s32.totalorder %v712, 2
  %vm714 = vcmp.eq.s32.totalorder %v712, 0
  %v715 = vxor.u32 %v710, 2147483648
  %v716 = vsel %vm714, %v709, %v715
  %vm717 = vcmp.eq.s32.totalorder %v712, 2
  %v718 = vxor.u32 %v709, 2147483648
  %v719 = vsel %vm717, %v718, %v710
  %v720 = vsel %vm713, %v716, %v719
  %v721 = vsel %vm711, nan, %v720
  %v722 = vand.u32 2147483647, %v84
  %vm723 = vcmp.le.f32.partialorder %v722, 0.7853982
  %vm724 = vcmp.lt.s32.totalorder %v84, 0
  %v725 = vand.u32 %v84, 2139095040
  %v726 = vshrl.u32 %v725, 23
  %v727 = vsub.s32 %v726, 127
  %v728 = vand.u32 2147483647, %v84
  %v729 = vand.u32 %v728, 8388607
  %v730 = vor.u32 %v729, 8388608
  %v731 = vsub.s32 0, %v730
  %v732 = vadd.s32 %v727, 1
  %vm733 = vcmp.gt.s32.totalorder %v732, 0
  %v734 = vsel %vm733, %v732, 0
  %v735 = vshrl.u32 %v734, 5
  %v736 = vand.u32 %v734, 31
  %v737 = vsub.s32 32, %v736
  %v738 = vshrl.u32 683565275, %v737
  %v739 = vshll.u32 683565275, %v736
  %v740 = vshrl.u32 2475754826, %v737
  %v741 = vor.u32 %v739, %v740
  %v742 = vshll.u32 2475754826, %v736
  %v743 = vshrl.u32 2131351028, %v737
  %v744 = vor.u32 %v742, %v743
  %v745 = vshll.u32 2131351028, %v736
  %v746 = vshrl.u32 2102212464, %v737
  %v747 = vor.u32 %v745, %v746
  %v748 = vshll.u32 2102212464, %v736
  %v749 = vshrl.u32 920167782, %v737
  %v750 = vor.u32 %v748, %v749
  %v751 = vshll.u32 920167782, %v736
  %v752 = vshrl.u32 1326507024, %v737
  %v753 = vor.u32 %v751, %v752
  %vm754 = vcmp.lt.s32.totalorder %v735, 1
  %vm755 = vcmp.lt.s32.totalorder %v735, 2
  %vm756 = vcmp.lt.s32.totalorder %v735, 3
  %vm757 = vcmp.lt.s32.totalorder %v735, 4
  %v758 = vsel %vm754, %v738, %v741
  %v759 = vsel %vm757, %v747, 2102212464
  %v760 = vsel %vm756, %v744, %v759
  %v761 = vsel %vm755, %v758, %v760
  %v762 = vsel %vm754, %v741, %v744
  %v763 = vsel %vm757, %v750, 920167782
  %v764 = vsel %vm756, %v747, %v763
  %v765 = vsel %vm755, %v762, %v764
  %v766 = vsel %vm754, %v744, %v747
  %v767 = vsel %vm757, %v753, 1326507024
  %v768 = vsel %vm756, %v750, %v767
  %v769 = vsel %vm755, %v766, %v768
  %v770 = vshll.u32 %v730, 8
  %v771 = vmul.u32.u64.compose %v770, %v769
  %v772 = vextract.low.u32 %v771
  %v773 = vextract.high.u32 %v771
  %v774 = vmul.u32.u64.compose %v770, %v765
  %v775 = vextract.low.u32 %v774
  %v776 = vextract.high.u32 %v774
  %v777 = vmul.u32 %v770, %v761
  %v778 = vadd.s32 %v773, %v775
  %vm779 = vc.u32 %v773, %v775
  %v780 = vadd.s32 %v776, 1
  %v781 = vsel %vm779, %v780, %v776
  %v782 = vadd.s32 %v777, %v781
  %v783 = vadd.s32 %v782, 536870912
  %v784 = vshrl.u32 %v783, 30
  %v785 = vshll.u32 %v784, 30
  %v786 = vsub.s32 %v782, %v785
  %vm787 = vcmp.lt.s32.totalorder %v786, 0
  %v788 = vsub.s32 0, %v786
  %v789 = vsel %vm787, %v788, %v786
  %v790 = vclz %v789
  %v791 = vsub.s32 %v790, 2
  %vm792 = vcmp.gt.s32.totalorder 0, %v791
  %v793 = vsel %vm792, 0, %v791
  %v794 = vsub.s32 32, %v793
  %v795 = vshll.u32 %v786, %v793
  %v796 = vshrl.u32 %v778, %v794
  %v797 = vor.u32 %v795, %v796
  %v798 = vsub.s32 4294967266, %v793
  %v799 = vadd.s32 %v798, 127
  %v800 = vshll.u32 %v799, 23
  %v801 = vor.u32 4788187, %v800
  %v802 = vand.u32 2147483647, %v801
  %v804 = vcvt.s32.f32 %v797
  %v805 = vmul.f32 %v804, %v802
  %v806 = vxor.u32 %v805, 2147483648
  %v807 = vsel %vm724, %v806, %v805
  %v808 = vsub.s32 4, %v784
  %v809 = vsel %vm724, %v808, %v784
  %v810 = vsel %vm723, %v84, %v807
  %v811 = vsel %vm723, 0, %v809
  %v812 = vcosq.f32.pop %v810
  %v813 = vsinq.f32.pop %v810
  %vm814 = vweird.f32 %v84
  %v815 = vadd.s32 %v811, 3
  %v816 = vand.u32 %v815, 3
  %vm817 = vcmp.lt.s32.totalorder %v816, 2
  %vm818 = vcmp.eq.s32.totalorder %v816, 0
  %v819 = vxor.u32 %v813, 2147483648
  %v820 = vsel %vm818, %v812, %v819
  %vm821 = vcmp.eq.s32.totalorder %v816, 2
  %v822 = vxor.u32 %v812, 2147483648
  %v823 = vsel %vm821, %v822, %v813
  %v824 = vsel %vm817, %v820, %v823
  %v825 = vsel %vm814, nan, %v824
  %v826 = vand.u32 2147483647, %v85
  %vm827 = vcmp.le.f32.partialorder %v826, 0.7853982
  %vm828 = vcmp.lt.s32.totalorder %v85, 0
  %v829 = vand.u32 %v85, 2139095040
  %v830 = vshrl.u32 %v829, 23
  %v831 = vsub.s32 %v830, 127
  %v832 = vand.u32 2147483647, %v85
  %v833 = vand.u32 %v832, 8388607
  %v834 = vor.u32 %v833, 8388608
  %v835 = vsub.s32 0, %v834
  %v836 = vadd.s32 %v831, 1
  %vm837 = vcmp.gt.s32.totalorder %v836, 0
  %v838 = vsel %vm837, %v836, 0
  %v839 = vshrl.u32 %v838, 5
  %v840 = vand.u32 %v838, 31
  %v841 = vsub.s32 32, %v840
  %v842 = vshrl.u32 683565275, %v841
  %v843 = vshll.u32 683565275, %v840
  %v844 = vshrl.u32 2475754826, %v841
  %v845 = vor.u32 %v843, %v844
  %v846 = vshll.u32 2475754826, %v840
  %v847 = vshrl.u32 2131351028, %v841
  %v848 = vor.u32 %v846, %v847
  %v849 = vshll.u32 2131351028, %v840
  %v850 = vshrl.u32 2102212464, %v841
  %v851 = vor.u32 %v849, %v850
  %v852 = vshll.u32 2102212464, %v840
  %v853 = vshrl.u32 920167782, %v841
  %v854 = vor.u32 %v852, %v853
  %v855 = vshll.u32 920167782, %v840
  %v856 = vshrl.u32 1326507024, %v841
  %v857 = vor.u32 %v855, %v856
  %vm858 = vcmp.lt.s32.totalorder %v839, 1
  %vm859 = vcmp.lt.s32.totalorder %v839, 2
  %vm860 = vcmp.lt.s32.totalorder %v839, 3
  %vm861 = vcmp.lt.s32.totalorder %v839, 4
  %v862 = vsel %vm858, %v842, %v845
  %v863 = vsel %vm861, %v851, 2102212464
  %v864 = vsel %vm860, %v848, %v863
  %v865 = vsel %vm859, %v862, %v864
  %v866 = vsel %vm858, %v845, %v848
  %v867 = vsel %vm861, %v854, 920167782
  %v868 = vsel %vm860, %v851, %v867
  %v869 = vsel %vm859, %v866, %v868
  %v870 = vsel %vm858, %v848, %v851
  %v871 = vsel %vm861, %v857, 1326507024
  %v872 = vsel %vm860, %v854, %v871
  %v873 = vsel %vm859, %v870, %v872
  %v874 = vshll.u32 %v834, 8
  %v875 = vmul.u32.u64.compose %v874, %v873
  %v876 = vextract.low.u32 %v875
  %v877 = vextract.high.u32 %v875
  %v878 = vmul.u32.u64.compose %v874, %v869
  %v879 = vextract.low.u32 %v878
  %v880 = vextract.high.u32 %v878
  %v881 = vmul.u32 %v874, %v865
  %v882 = vadd.s32 %v877, %v879
  %vm883 = vc.u32 %v877, %v879
  %v884 = vadd.s32 %v880, 1
  %v885 = vsel %vm883, %v884, %v880
  %v886 = vadd.s32 %v881, %v885
  %v887 = vadd.s32 %v886, 536870912
  %v888 = vshrl.u32 %v887, 30
  %v889 = vshll.u32 %v888, 30
  %v890 = vsub.s32 %v886, %v889
  %vm891 = vcmp.lt.s32.totalorder %v890, 0
  %v892 = vsub.s32 0, %v890
  %v893 = vsel %vm891, %v892, %v890
  %v894 = vclz %v893
  %v895 = vsub.s32 %v894, 2
  %vm896 = vcmp.gt.s32.totalorder 0, %v895
  %v897 = vsel %vm896, 0, %v895
  %v898 = vsub.s32 32, %v897
  %v899 = vshll.u32 %v890, %v897
  %v900 = vshrl.u32 %v882, %v898
  %v901 = vor.u32 %v899, %v900
  %v902 = vsub.s32 4294967266, %v897
  %v903 = vadd.s32 %v902, 127
  %v904 = vshll.u32 %v903, 23
  %v905 = vor.u32 4788187, %v904
  %v906 = vand.u32 2147483647, %v905
  %v908 = vcvt.s32.f32 %v901
  %v909 = vmul.f32 %v908, %v906
  %v910 = vxor.u32 %v909, 2147483648
  %v911 = vsel %vm828, %v910, %v909
  %v912 = vsub.s32 4, %v888
  %v913 = vsel %vm828, %v912, %v888
  %v914 = vsel %vm827, %v85, %v911
  %v915 = vsel %vm827, 0, %v913
  %v916 = vcosq.f32.pop %v914
  %v917 = vsinq.f32.pop %v914
  %vm918 = vweird.f32 %v85
  %v919 = vadd.s32 %v915, 3
  %v920 = vand.u32 %v919, 3
  %vm921 = vcmp.lt.s32.totalorder %v920, 2
  %vm922 = vcmp.eq.s32.totalorder %v920, 0
  %v923 = vxor.u32 %v917, 2147483648
  %v924 = vsel %vm922, %v916, %v923
  %vm925 = vcmp.eq.s32.totalorder %v920, 2
  %v926 = vxor.u32 %v916, 2147483648
  %v927 = vsel %vm925, %v926, %v917
  %v928 = vsel %vm921, %v924, %v927
  %v929 = vsel %vm918, nan, %v928
  %v930 = vand.u32 2147483647, %v100
  %vm931 = vcmp.le.f32.partialorder %v930, 0.7853982
  %vm932 = vcmp.lt.s32.totalorder %v100, 0
  %v933 = vand.u32 %v100, 2139095040
  %v934 = vshrl.u32 %v933, 23
  %v935 = vsub.s32 %v934, 127
  %v936 = vand.u32 2147483647, %v100
  %v937 = vand.u32 %v936, 8388607
  %v938 = vor.u32 %v937, 8388608
  %v939 = vsub.s32 0, %v938
  %v940 = vadd.s32 %v935, 1
  %vm941 = vcmp.gt.s32.totalorder %v940, 0
  %v942 = vsel %vm941, %v940, 0
  %v943 = vshrl.u32 %v942, 5
  %v944 = vand.u32 %v942, 31
  %v945 = vsub.s32 32, %v944
  %v946 = vshrl.u32 683565275, %v945
  %v947 = vshll.u32 683565275, %v944
  %v948 = vshrl.u32 2475754826, %v945
  %v949 = vor.u32 %v947, %v948
  %v950 = vshll.u32 2475754826, %v944
  %v951 = vshrl.u32 2131351028, %v945
  %v952 = vor.u32 %v950, %v951
  %v953 = vshll.u32 2131351028, %v944
  %v954 = vshrl.u32 2102212464, %v945
  %v955 = vor.u32 %v953, %v954
  %v956 = vshll.u32 2102212464, %v944
  %v957 = vshrl.u32 920167782, %v945
  %v958 = vor.u32 %v956, %v957
  %v959 = vshll.u32 920167782, %v944
  %v960 = vshrl.u32 1326507024, %v945
  %v961 = vor.u32 %v959, %v960
  %vm962 = vcmp.lt.s32.totalorder %v943, 1
  %vm963 = vcmp.lt.s32.totalorder %v943, 2
  %vm964 = vcmp.lt.s32.totalorder %v943, 3
  %vm965 = vcmp.lt.s32.totalorder %v943, 4
  %v966 = vsel %vm962, %v946, %v949
  %v967 = vsel %vm965, %v955, 2102212464
  %v968 = vsel %vm964, %v952, %v967
  %v969 = vsel %vm963, %v966, %v968
  %v970 = vsel %vm962, %v949, %v952
  %v971 = vsel %vm965, %v958, 920167782
  %v972 = vsel %vm964, %v955, %v971
  %v973 = vsel %vm963, %v970, %v972
  %v974 = vsel %vm962, %v952, %v955
  %v975 = vsel %vm965, %v961, 1326507024
  %v976 = vsel %vm964, %v958, %v975
  %v977 = vsel %vm963, %v974, %v976
  %v978 = vshll.u32 %v938, 8
  %v979 = vmul.u32.u64.compose %v978, %v977
  %v980 = vextract.low.u32 %v979
  %v981 = vextract.high.u32 %v979
  %v982 = vmul.u32.u64.compose %v978, %v973
  %v983 = vextract.low.u32 %v982
  %v984 = vextract.high.u32 %v982
  %v985 = vmul.u32 %v978, %v969
  %v986 = vadd.s32 %v981, %v983
  %vm987 = vc.u32 %v981, %v983
  %v988 = vadd.s32 %v984, 1
  %v989 = vsel %vm987, %v988, %v984
  %v990 = vadd.s32 %v985, %v989
  %v991 = vadd.s32 %v990, 536870912
  %v992 = vshrl.u32 %v991, 30
  %v993 = vshll.u32 %v992, 30
  %v994 = vsub.s32 %v990, %v993
  %vm995 = vcmp.lt.s32.totalorder %v994, 0
  %v996 = vsub.s32 0, %v994
  %v997 = vsel %vm995, %v996, %v994
  %v998 = vclz %v997
  %v999 = vsub.s32 %v998, 2
  %vm1000 = vcmp.gt.s32.totalorder 0, %v999
  %v1001 = vsel %vm1000, 0, %v999
  %v1002 = vsub.s32 32, %v1001
  %v1003 = vshll.u32 %v994, %v1001
  %v1004 = vshrl.u32 %v986, %v1002
  %v1005 = vor.u32 %v1003, %v1004
  %v1006 = vsub.s32 4294967266, %v1001
  %v1007 = vadd.s32 %v1006, 127
  %v1008 = vshll.u32 %v1007, 23
  %v1009 = vor.u32 4788187, %v1008
  %v1010 = vand.u32 2147483647, %v1009
  %v1012 = vcvt.s32.f32 %v1005
  %v1013 = vmul.f32 %v1012, %v1010
  %v1014 = vxor.u32 %v1013, 2147483648
  %v1015 = vsel %vm932, %v1014, %v1013
  %v1016 = vsub.s32 4, %v992
  %v1017 = vsel %vm932, %v1016, %v992
  %v1018 = vsel %vm931, %v100, %v1015
  %v1019 = vsel %vm931, 0, %v1017
  %v1020 = vcosq.f32.pop %v1018
  %v1021 = vsinq.f32.pop %v1018
  %vm1022 = vweird.f32 %v100
  %v1023 = vand.u32 %v1019, 3
  %vm1024 = vcmp.lt.s32.totalorder %v1023, 2
  %vm1025 = vcmp.eq.s32.totalorder %v1023, 0
  %v1026 = vxor.u32 %v1021, 2147483648
  %v1027 = vsel %vm1025, %v1020, %v1026
  %vm1028 = vcmp.eq.s32.totalorder %v1023, 2
  %v1029 = vxor.u32 %v1020, 2147483648
  %v1030 = vsel %vm1028, %v1029, %v1021
  %v1031 = vsel %vm1024, %v1027, %v1030
  %v1032 = vsel %vm1022, nan, %v1031
  %v1033 = vand.u32 2147483647, %v101
  %vm1034 = vcmp.le.f32.partialorder %v1033, 0.7853982
  %vm1035 = vcmp.lt.s32.totalorder %v101, 0
  %v1036 = vand.u32 %v101, 2139095040
  %v1037 = vshrl.u32 %v1036, 23
  %v1038 = vsub.s32 %v1037, 127
  %v1039 = vand.u32 2147483647, %v101
  %v1040 = vand.u32 %v1039, 8388607
  %v1041 = vor.u32 %v1040, 8388608
  %v1042 = vsub.s32 0, %v1041
  %v1043 = vadd.s32 %v1038, 1
  %vm1044 = vcmp.gt.s32.totalorder %v1043, 0
  %v1045 = vsel %vm1044, %v1043, 0
  %v1046 = vshrl.u32 %v1045, 5
  %v1047 = vand.u32 %v1045, 31
  %v1048 = vsub.s32 32, %v1047
  %v1049 = vshrl.u32 683565275, %v1048
  %v1050 = vshll.u32 683565275, %v1047
  %v1051 = vshrl.u32 2475754826, %v1048
  %v1052 = vor.u32 %v1050, %v1051
  %v1053 = vshll.u32 2475754826, %v1047
  %v1054 = vshrl.u32 2131351028, %v1048
  %v1055 = vor.u32 %v1053, %v1054
  %v1056 = vshll.u32 2131351028, %v1047
  %v1057 = vshrl.u32 2102212464, %v1048
  %v1058 = vor.u32 %v1056, %v1057
  %v1059 = vshll.u32 2102212464, %v1047
  %v1060 = vshrl.u32 920167782, %v1048
  %v1061 = vor.u32 %v1059, %v1060
  %v1062 = vshll.u32 920167782, %v1047
  %v1063 = vshrl.u32 1326507024, %v1048
  %v1064 = vor.u32 %v1062, %v1063
  %vm1065 = vcmp.lt.s32.totalorder %v1046, 1
  %vm1066 = vcmp.lt.s32.totalorder %v1046, 2
  %vm1067 = vcmp.lt.s32.totalorder %v1046, 3
  %vm1068 = vcmp.lt.s32.totalorder %v1046, 4
  %v1069 = vsel %vm1065, %v1049, %v1052
  %v1070 = vsel %vm1068, %v1058, 2102212464
  %v1071 = vsel %vm1067, %v1055, %v1070
  %v1072 = vsel %vm1066, %v1069, %v1071
  %v1073 = vsel %vm1065, %v1052, %v1055
  %v1074 = vsel %vm1068, %v1061, 920167782
  %v1075 = vsel %vm1067, %v1058, %v1074
  %v1076 = vsel %vm1066, %v1073, %v1075
  %v1077 = vsel %vm1065, %v1055, %v1058
  %v1078 = vsel %vm1068, %v1064, 1326507024
  %v1079 = vsel %vm1067, %v1061, %v1078
  %v1080 = vsel %vm1066, %v1077, %v1079
  %v1081 = vshll.u32 %v1041, 8
  %v1082 = vmul.u32.u64.compose %v1081, %v1080
  %v1083 = vextract.low.u32 %v1082
  %v1084 = vextract.high.u32 %v1082
  %v1085 = vmul.u32.u64.compose %v1081, %v1076
  %v1086 = vextract.low.u32 %v1085
  %v1087 = vextract.high.u32 %v1085
  %v1088 = vmul.u32 %v1081, %v1072
  %v1089 = vadd.s32 %v1084, %v1086
  %vm1090 = vc.u32 %v1084, %v1086
  %v1091 = vadd.s32 %v1087, 1
  %v1092 = vsel %vm1090, %v1091, %v1087
  %v1093 = vadd.s32 %v1088, %v1092
  %v1094 = vadd.s32 %v1093, 536870912
  %v1095 = vshrl.u32 %v1094, 30
  %v1096 = vshll.u32 %v1095, 30
  %v1097 = vsub.s32 %v1093, %v1096
  %vm1098 = vcmp.lt.s32.totalorder %v1097, 0
  %v1099 = vsub.s32 0, %v1097
  %v1100 = vsel %vm1098, %v1099, %v1097
  %v1101 = vclz %v1100
  %v1102 = vsub.s32 %v1101, 2
  %vm1103 = vcmp.gt.s32.totalorder 0, %v1102
  %v1104 = vsel %vm1103, 0, %v1102
  %v1105 = vsub.s32 32, %v1104
  %v1106 = vshll.u32 %v1097, %v1104
  %v1107 = vshrl.u32 %v1089, %v1105
  %v1108 = vor.u32 %v1106, %v1107
  %v1109 = vsub.s32 4294967266, %v1104
  %v1110 = vadd.s32 %v1109, 127
  %v1111 = vshll.u32 %v1110, 23
  %v1112 = vor.u32 4788187, %v1111
  %v1113 = vand.u32 2147483647, %v1112
  %v1115 = vcvt.s32.f32 %v1108
  %v1116 = vmul.f32 %v1115, %v1113
  %v1117 = vxor.u32 %v1116, 2147483648
  %v1118 = vsel %vm1035, %v1117, %v1116
  %v1119 = vsub.s32 4, %v1095
  %v1120 = vsel %vm1035, %v1119, %v1095
  %v1121 = vsel %vm1034, %v101, %v1118
  %v1122 = vsel %vm1034, 0, %v1120
  %v1123 = vcosq.f32.pop %v1121
  %v1124 = vsinq.f32.pop %v1121
  %vm1125 = vweird.f32 %v101
  %v1126 = vand.u32 %v1122, 3
  %vm1127 = vcmp.lt.s32.totalorder %v1126, 2
  %vm1128 = vcmp.eq.s32.totalorder %v1126, 0
  %v1129 = vxor.u32 %v1124, 2147483648
  %v1130 = vsel %vm1128, %v1123, %v1129
  %vm1131 = vcmp.eq.s32.totalorder %v1126, 2
  %v1132 = vxor.u32 %v1123, 2147483648
  %v1133 = vsel %vm1131, %v1132, %v1124
  %v1134 = vsel %vm1127, %v1130, %v1133
  %v1135 = vsel %vm1125, nan, %v1134
  %v1136 = vand.u32 2147483647, %v100
  %vm1137 = vcmp.le.f32.partialorder %v1136, 0.7853982
  %vm1138 = vcmp.lt.s32.totalorder %v100, 0
  %v1139 = vand.u32 %v100, 2139095040
  %v1140 = vshrl.u32 %v1139, 23
  %v1141 = vsub.s32 %v1140, 127
  %v1142 = vand.u32 2147483647, %v100
  %v1143 = vand.u32 %v1142, 8388607
  %v1144 = vor.u32 %v1143, 8388608
  %v1145 = vsub.s32 0, %v1144
  %v1146 = vadd.s32 %v1141, 1
  %vm1147 = vcmp.gt.s32.totalorder %v1146, 0
  %v1148 = vsel %vm1147, %v1146, 0
  %v1149 = vshrl.u32 %v1148, 5
  %v1150 = vand.u32 %v1148, 31
  %v1151 = vsub.s32 32, %v1150
  %v1152 = vshrl.u32 683565275, %v1151
  %v1153 = vshll.u32 683565275, %v1150
  %v1154 = vshrl.u32 2475754826, %v1151
  %v1155 = vor.u32 %v1153, %v1154
  %v1156 = vshll.u32 2475754826, %v1150
  %v1157 = vshrl.u32 2131351028, %v1151
  %v1158 = vor.u32 %v1156, %v1157
  %v1159 = vshll.u32 2131351028, %v1150
  %v1160 = vshrl.u32 2102212464, %v1151
  %v1161 = vor.u32 %v1159, %v1160
  %v1162 = vshll.u32 2102212464, %v1150
  %v1163 = vshrl.u32 920167782, %v1151
  %v1164 = vor.u32 %v1162, %v1163
  %v1165 = vshll.u32 920167782, %v1150
  %v1166 = vshrl.u32 1326507024, %v1151
  %v1167 = vor.u32 %v1165, %v1166
  %vm1168 = vcmp.lt.s32.totalorder %v1149, 1
  %vm1169 = vcmp.lt.s32.totalorder %v1149, 2
  %vm1170 = vcmp.lt.s32.totalorder %v1149, 3
  %vm1171 = vcmp.lt.s32.totalorder %v1149, 4
  %v1172 = vsel %vm1168, %v1152, %v1155
  %v1173 = vsel %vm1171, %v1161, 2102212464
  %v1174 = vsel %vm1170, %v1158, %v1173
  %v1175 = vsel %vm1169, %v1172, %v1174
  %v1176 = vsel %vm1168, %v1155, %v1158
  %v1177 = vsel %vm1171, %v1164, 920167782
  %v1178 = vsel %vm1170, %v1161, %v1177
  %v1179 = vsel %vm1169, %v1176, %v1178
  %v1180 = vsel %vm1168, %v1158, %v1161
  %v1181 = vsel %vm1171, %v1167, 1326507024
  %v1182 = vsel %vm1170, %v1164, %v1181
  %v1183 = vsel %vm1169, %v1180, %v1182
  %v1184 = vshll.u32 %v1144, 8
  %v1185 = vmul.u32.u64.compose %v1184, %v1183
  %v1186 = vextract.low.u32 %v1185
  %v1187 = vextract.high.u32 %v1185
  %v1188 = vmul.u32.u64.compose %v1184, %v1179
  %v1189 = vextract.low.u32 %v1188
  %v1190 = vextract.high.u32 %v1188
  %v1191 = vmul.u32 %v1184, %v1175
  %v1192 = vadd.s32 %v1187, %v1189
  %vm1193 = vc.u32 %v1187, %v1189
  %v1194 = vadd.s32 %v1190, 1
  %v1195 = vsel %vm1193, %v1194, %v1190
  %v1196 = vadd.s32 %v1191, %v1195
  %v1197 = vadd.s32 %v1196, 536870912
  %v1198 = vshrl.u32 %v1197, 30
  %v1199 = vshll.u32 %v1198, 30
  %v1200 = vsub.s32 %v1196, %v1199
  %vm1201 = vcmp.lt.s32.totalorder %v1200, 0
  %v1202 = vsub.s32 0, %v1200
  %v1203 = vsel %vm1201, %v1202, %v1200
  %v1204 = vclz %v1203
  %v1205 = vsub.s32 %v1204, 2
  %vm1206 = vcmp.gt.s32.totalorder 0, %v1205
  %v1207 = vsel %vm1206, 0, %v1205
  %v1208 = vsub.s32 32, %v1207
  %v1209 = vshll.u32 %v1200, %v1207
  %v1210 = vshrl.u32 %v1192, %v1208
  %v1211 = vor.u32 %v1209, %v1210
  %v1212 = vsub.s32 4294967266, %v1207
  %v1213 = vadd.s32 %v1212, 127
  %v1214 = vshll.u32 %v1213, 23
  %v1215 = vor.u32 4788187, %v1214
  %v1216 = vand.u32 2147483647, %v1215
  %v1218 = vcvt.s32.f32 %v1211
  %v1219 = vmul.f32 %v1218, %v1216
  %v1220 = vxor.u32 %v1219, 2147483648
  %v1221 = vsel %vm1138, %v1220, %v1219
  %v1222 = vsub.s32 4, %v1198
  %v1223 = vsel %vm1138, %v1222, %v1198
  %v1224 = vsel %vm1137, %v100, %v1221
  %v1225 = vsel %vm1137, 0, %v1223
  %v1226 = vcosq.f32.pop %v1224
  %v1227 = vsinq.f32.pop %v1224
  %vm1228 = vweird.f32 %v100
  %v1229 = vadd.s32 %v1225, 3
  %v1230 = vand.u32 %v1229, 3
  %vm1231 = vcmp.lt.s32.totalorder %v1230, 2
  %vm1232 = vcmp.eq.s32.totalorder %v1230, 0
  %v1233 = vxor.u32 %v1227, 2147483648
  %v1234 = vsel %vm1232, %v1226, %v1233
  %vm1235 = vcmp.eq.s32.totalorder %v1230, 2
  %v1236 = vxor.u32 %v1226, 2147483648
  %v1237 = vsel %vm1235, %v1236, %v1227
  %v1238 = vsel %vm1231, %v1234, %v1237
  %v1239 = vsel %vm1228, nan, %v1238
  %v1240 = vand.u32 2147483647, %v101
  %vm1241 = vcmp.le.f32.partialorder %v1240, 0.7853982
  %vm1242 = vcmp.lt.s32.totalorder %v101, 0
  %v1243 = vand.u32 %v101, 2139095040
  %v1244 = vshrl.u32 %v1243, 23
  %v1245 = vsub.s32 %v1244, 127
  %v1246 = vand.u32 2147483647, %v101
  %v1247 = vand.u32 %v1246, 8388607
  %v1248 = vor.u32 %v1247, 8388608
  %v1249 = vsub.s32 0, %v1248
  %v1250 = vadd.s32 %v1245, 1
  %vm1251 = vcmp.gt.s32.totalorder %v1250, 0
  %v1252 = vsel %vm1251, %v1250, 0
  %v1253 = vshrl.u32 %v1252, 5
  %v1254 = vand.u32 %v1252, 31
  %v1255 = vsub.s32 32, %v1254
  %v1256 = vshrl.u32 683565275, %v1255
  %v1257 = vshll.u32 683565275, %v1254
  %v1258 = vshrl.u32 2475754826, %v1255
  %v1259 = vor.u32 %v1257, %v1258
  %v1260 = vshll.u32 2475754826, %v1254
  %v1261 = vshrl.u32 2131351028, %v1255
  %v1262 = vor.u32 %v1260, %v1261
  %v1263 = vshll.u32 2131351028, %v1254
  %v1264 = vshrl.u32 2102212464, %v1255
  %v1265 = vor.u32 %v1263, %v1264
  %v1266 = vshll.u32 2102212464, %v1254
  %v1267 = vshrl.u32 920167782, %v1255
  %v1268 = vor.u32 %v1266, %v1267
  %v1269 = vshll.u32 920167782, %v1254
  %v1270 = vshrl.u32 1326507024, %v1255
  %v1271 = vor.u32 %v1269, %v1270
  %vm1272 = vcmp.lt.s32.totalorder %v1253, 1
  %vm1273 = vcmp.lt.s32.totalorder %v1253, 2
  %vm1274 = vcmp.lt.s32.totalorder %v1253, 3
  %vm1275 = vcmp.lt.s32.totalorder %v1253, 4
  %v1276 = vsel %vm1272, %v1256, %v1259
  %v1277 = vsel %vm1275, %v1265, 2102212464
  %v1278 = vsel %vm1274, %v1262, %v1277
  %v1279 = vsel %vm1273, %v1276, %v1278
  %v1280 = vsel %vm1272, %v1259, %v1262
  %v1281 = vsel %vm1275, %v1268, 920167782
  %v1282 = vsel %vm1274, %v1265, %v1281
  %v1283 = vsel %vm1273, %v1280, %v1282
  %v1284 = vsel %vm1272, %v1262, %v1265
  %v1285 = vsel %vm1275, %v1271, 1326507024
  %v1286 = vsel %vm1274, %v1268, %v1285
  %v1287 = vsel %vm1273, %v1284, %v1286
  %v1288 = vshll.u32 %v1248, 8
  %v1289 = vmul.u32.u64.compose %v1288, %v1287
  %v1290 = vextract.low.u32 %v1289
  %v1291 = vextract.high.u32 %v1289
  %v1292 = vmul.u32.u64.compose %v1288, %v1283
  %v1293 = vextract.low.u32 %v1292
  %v1294 = vextract.high.u32 %v1292
  %v1295 = vmul.u32 %v1288, %v1279
  %v1296 = vadd.s32 %v1291, %v1293
  %vm1297 = vc.u32 %v1291, %v1293
  %v1298 = vadd.s32 %v1294, 1
  %v1299 = vsel %vm1297, %v1298, %v1294
  %v1300 = vadd.s32 %v1295, %v1299
  %v1301 = vadd.s32 %v1300, 536870912
  %v1302 = vshrl.u32 %v1301, 30
  %v1303 = vshll.u32 %v1302, 30
  %v1304 = vsub.s32 %v1300, %v1303
  %vm1305 = vcmp.lt.s32.totalorder %v1304, 0
  %v1306 = vsub.s32 0, %v1304
  %v1307 = vsel %vm1305, %v1306, %v1304
  %v1308 = vclz %v1307
  %v1309 = vsub.s32 %v1308, 2
  %vm1310 = vcmp.gt.s32.totalorder 0, %v1309
  %v1311 = vsel %vm1310, 0, %v1309
  %v1312 = vsub.s32 32, %v1311
  %v1313 = vshll.u32 %v1304, %v1311
  %v1314 = vshrl.u32 %v1296, %v1312
  %v1315 = vor.u32 %v1313, %v1314
  %v1316 = vsub.s32 4294967266, %v1311
  %v1317 = vadd.s32 %v1316, 127
  %v1318 = vshll.u32 %v1317, 23
  %v1319 = vor.u32 4788187, %v1318
  %v1320 = vand.u32 2147483647, %v1319
  %v1322 = vcvt.s32.f32 %v1315
  %v1323 = vmul.f32 %v1322, %v1320
  %v1324 = vxor.u32 %v1323, 2147483648
  %v1325 = vsel %vm1242, %v1324, %v1323
  %v1326 = vsub.s32 4, %v1302
  %v1327 = vsel %vm1242, %v1326, %v1302
  %v1328 = vsel %vm1241, %v101, %v1325
  %v1329 = vsel %vm1241, 0, %v1327
  %v1330 = vcosq.f32.pop %v1328
  %v1331 = vsinq.f32.pop %v1328
  %vm1332 = vweird.f32 %v101
  %v1333 = vadd.s32 %v1329, 3
  %v1334 = vand.u32 %v1333, 3
  %vm1335 = vcmp.lt.s32.totalorder %v1334, 2
  %vm1336 = vcmp.eq.s32.totalorder %v1334, 0
  %v1337 = vxor.u32 %v1331, 2147483648
  %v1338 = vsel %vm1336, %v1330, %v1337
  %vm1339 = vcmp.eq.s32.totalorder %v1334, 2
  %v1340 = vxor.u32 %v1330, 2147483648
  %v1341 = vsel %vm1339, %v1340, %v1331
  %v1342 = vsel %vm1335, %v1338, %v1341
  %v1343 = vsel %vm1332, nan, %v1342
  %v1344 = vadd.f32 %v204, 1.0
  %v1345 = vadd.f32 %v307, 1.0
  %v1346 = vmul.f32 %v1344, 0.5
  %v1347 = vmul.f32 %v1345, 0.5
  %v1348 = vsub.f32 1.0, %v204
  %v1349 = vsub.f32 1.0, %v307
  %v1350 = vmul.f32 %v1348, 0.5
  %v1351 = vmul.f32 %v1349, 0.5
  %v1352 = vmul.f32 %v411, 0.5
  %v1353 = vmul.f32 %v515, 0.5
  %v1354 = vmul.f32 %v618, %v1032
  %v1355 = vmul.f32 %v721, %v1135
  %v1356 = vmul.f32 %v825, %v1239
  %v1357 = vmul.f32 %v929, %v1343
  %v1358 = vmul.f32 %v825, %v1032
  %v1359 = vmul.f32 %v929, %v1135
  %v1360 = vmul.f32 %v618, %v1239
  %v1361 = vmul.f32 %v721, %v1343
  %v1362 = vsub.f32 %v1354, %v1356
  %v1363 = vsub.f32 %v1355, %v1357
  %v1364 = vadd.f32 %v1358, %v1360
  %v1365 = vadd.f32 %v1359, %v1361
  %v1366 = vadd.f32 %v1354, %v1356
  %v1367 = vadd.f32 %v1355, %v1357
  %v1368 = vsub.f32 %v1358, %v1360
  %v1369 = vsub.f32 %v1359, %v1361
  %v1370 = vsub.f32 %v48, %v44
  %v1371 = vsub.f32 %v49, %v45
  %v1372 = vmul.f32 %v1350, %v1370
  %v1373 = vmul.f32 %v1351, %v1371
  %v1374 = vmul.f32 %v1352, 2.0
  %v1375 = vmul.f32 %v1353, 2.0
  %v1376 = vmul.f32 %v1032, %v52
  %v1377 = vmul.f32 %v1135, %v53
  %v1378 = vmul.f32 %v1239, %v56
  %v1379 = vmul.f32 %v1343, %v57
  %v1380 = vsub.f32 %v1376, %v1378
  %v1381 = vsub.f32 %v1377, %v1379
  %v1382 = vmul.f32 %v1374, %v1380
  %v1383 = vmul.f32 %v1375, %v1381
  %v1384 = vsub.f32 %v1372, %v1382
  %v1385 = vsub.f32 %v1373, %v1383
  %v1386 = vadd.f32 %v44, %v1384
  %v1387 = vadd.f32 %v45, %v1385
  %v1388 = vsub.f32 %v48, %v1384
  %v1389 = vsub.f32 %v49, %v1385
  %v1390 = vmul.f32 %v1346, %v1362
  %v1391 = vmul.f32 %v1347, %v1363
  %v1392 = vmul.f32 %v1350, %v1366
  %v1393 = vmul.f32 %v1351, %v1367
  %v1394 = vmul.f32 %v1346, %v1364
  %v1395 = vmul.f32 %v1347, %v1365
  %v1396 = vmul.f32 %v1350, %v1368
  %v1397 = vmul.f32 %v1351, %v1369
  %v1398 = vsub.f32 %v1390, %v1392
  %v1399 = vsub.f32 %v1391, %v1393
  %v1400 = vadd.f32 %v1394, %v1396
  %v1401 = vadd.f32 %v1395, %v1397
  %v1402 = vsub.f32 %v1394, %v1396
  %v1403 = vsub.f32 %v1395, %v1397
  %v1404 = vadd.f32 %v1390, %v1392
  %v1405 = vadd.f32 %v1391, %v1393
  %v1406 = vmul.f32 %v1352, %v1370
  %v1407 = vmul.f32 %v1353, %v1371
  %v1408 = vmul.f32 %v1398, %v52
  %v1409 = vmul.f32 %v1399, %v53
  %v1410 = vmul.f32 %v1400, %v56
  %v1411 = vmul.f32 %v1401, %v57
  %v1412 = vsub.f32 %v1408, %v1410
  %v1413 = vsub.f32 %v1409, %v1411
  %v1414 = vmul.f32 %v1406, %v618
  %v1415 = vmul.f32 %v1407, %v721
  %v1416 = vsub.f32 %v1412, %v1414
  %v1417 = vsub.f32 %v1413, %v1415
  %v1418 = vmul.f32 %v1402, %v52
  %v1419 = vmul.f32 %v1403, %v53
  %v1420 = vmul.f32 %v1404, %v56
  %v1421 = vmul.f32 %v1405, %v57
  %v1422 = vadd.f32 %v1418, %v1420
  %v1423 = vadd.f32 %v1419, %v1421
  %v1424 = vmul.f32 %v1406, %v825
  %v1425 = vmul.f32 %v1407, %v929
  %v1426 = vsub.f32 %v1422, %v1424
  %v1427 = vsub.f32 %v1423, %v1425
  %s1428 = sadd.s32 %s23, 3
  %s1429 = sld [smem:[#allocation4 + %s1428]]
  %s1430 = sld [smem:[#allocation3 + %s1428]]
  %s1431 = sadd.s32 0, 6
  %s1432 = smul.addr %s1431, 4
  %s1433 = scalar_lea.vmem %s2, %s1432
  %v1434 = vld [vmem:[%s1433] sm:$0xf]
  %v1435 = vld [vmem:[%s1433 + $0x4] sm:$0xf]
  %v1436 = vunpack.c.l.bf16 %v1434
  %v1437 = vunpack.c.l.bf16 %v1435
  %v1438 = vstv %s1430
  %v1439 = vmul.f32 %v1438, %v1436
  %v1440 = vmul.f32 %v1438, %v1437
  %v1441 = vstv %s1429
  %v1442 = vadd.f32 %v1441, %v1439
  %v1443 = vadd.f32 %v1441, %v1440
  %s1444 = sadd.s32 %s23, 4
  %s1445 = sld [smem:[#allocation4 + %s1444]]
  %s1446 = sld [smem:[#allocation3 + %s1444]]
  %s1447 = sadd.s32 0, 8
  %s1448 = smul.addr %s1447, 4
  %s1449 = scalar_lea.vmem %s2, %s1448
  %v1450 = vld [vmem:[%s1449] sm:$0xf]
  %v1451 = vld [vmem:[%s1449 + $0x4] sm:$0xf]
  %v1452 = vunpack.c.l.bf16 %v1450
  %v1453 = vunpack.c.l.bf16 %v1451
  %v1454 = vstv %s1446
  %v1455 = vmul.f32 %v1454, %v1452
  %v1456 = vmul.f32 %v1454, %v1453
  %v1457 = vstv %s1445
  %v1458 = vadd.f32 %v1457, %v1455
  %v1459 = vadd.f32 %v1457, %v1456
  %s1460 = sadd.s32 %s23, 5
  %s1461 = sld [smem:[#allocation4 + %s1460]]
  %s1462 = sld [smem:[#allocation3 + %s1460]]
  %s1463 = sadd.s32 0, 10
  %s1464 = smul.addr %s1463, 4
  %s1465 = scalar_lea.vmem %s2, %s1464
  %v1466 = vld [vmem:[%s1465] sm:$0xf]
  %v1467 = vld [vmem:[%s1465 + $0x4] sm:$0xf]
  %v1468 = vunpack.c.l.bf16 %v1466
  %v1469 = vunpack.c.l.bf16 %v1467
  %v1470 = vstv %s1462
  %v1471 = vmul.f32 %v1470, %v1468
  %v1472 = vmul.f32 %v1470, %v1469
  %v1473 = vstv %s1461
  %v1474 = vadd.f32 %v1473, %v1471
  %v1475 = vadd.f32 %v1473, %v1472
  %v1476 = vand.u32 2147483647, %v1442
  %vm1477 = vcmp.le.f32.partialorder %v1476, 0.7853982
  %vm1478 = vcmp.lt.s32.totalorder %v1442, 0
  %v1479 = vand.u32 %v1442, 2139095040
  %v1480 = vshrl.u32 %v1479, 23
  %v1481 = vsub.s32 %v1480, 127
  %v1482 = vand.u32 2147483647, %v1442
  %v1483 = vand.u32 %v1482, 8388607
  %v1484 = vor.u32 %v1483, 8388608
  %v1485 = vsub.s32 0, %v1484
  %v1486 = vadd.s32 %v1481, 1
  %vm1487 = vcmp.gt.s32.totalorder %v1486, 0
  %v1488 = vsel %vm1487, %v1486, 0
  %v1489 = vshrl.u32 %v1488, 5
  %v1490 = vand.u32 %v1488, 31
  %v1491 = vsub.s32 32, %v1490
  %v1492 = vshrl.u32 683565275, %v1491
  %v1493 = vshll.u32 683565275, %v1490
  %v1494 = vshrl.u32 2475754826, %v1491
  %v1495 = vor.u32 %v1493, %v1494
  %v1496 = vshll.u32 2475754826, %v1490
  %v1497 = vshrl.u32 2131351028, %v1491
  %v1498 = vor.u32 %v1496, %v1497
  %v1499 = vshll.u32 2131351028, %v1490
  %v1500 = vshrl.u32 2102212464, %v1491
  %v1501 = vor.u32 %v1499, %v1500
  %v1502 = vshll.u32 2102212464, %v1490
  %v1503 = vshrl.u32 920167782, %v1491
  %v1504 = vor.u32 %v1502, %v1503
  %v1505 = vshll.u32 920167782, %v1490
  %v1506 = vshrl.u32 1326507024, %v1491
  %v1507 = vor.u32 %v1505, %v1506
  %vm1508 = vcmp.lt.s32.totalorder %v1489, 1
  %vm1509 = vcmp.lt.s32.totalorder %v1489, 2
  %vm1510 = vcmp.lt.s32.totalorder %v1489, 3
  %vm1511 = vcmp.lt.s32.totalorder %v1489, 4
  %v1512 = vsel %vm1508, %v1492, %v1495
  %v1513 = vsel %vm1511, %v1501, 2102212464
  %v1514 = vsel %vm1510, %v1498, %v1513
  %v1515 = vsel %vm1509, %v1512, %v1514
  %v1516 = vsel %vm1508, %v1495, %v1498
  %v1517 = vsel %vm1511, %v1504, 920167782
  %v1518 = vsel %vm1510, %v1501, %v1517
  %v1519 = vsel %vm1509, %v1516, %v1518
  %v1520 = vsel %vm1508, %v1498, %v1501
  %v1521 = vsel %vm1511, %v1507, 1326507024
  %v1522 = vsel %vm1510, %v1504, %v1521
  %v1523 = vsel %vm1509, %v1520, %v1522
  %v1524 = vshll.u32 %v1484, 8
  %v1525 = vmul.u32.u64.compose %v1524, %v1523
  %v1526 = vextract.low.u32 %v1525
  %v1527 = vextract.high.u32 %v1525
  %v1528 = vmul.u32.u64.compose %v1524, %v1519
  %v1529 = vextract.low.u32 %v1528
  %v1530 = vextract.high.u32 %v1528
  %v1531 = vmul.u32 %v1524, %v1515
  %v1532 = vadd.s32 %v1527, %v1529
  %vm1533 = vc.u32 %v1527, %v1529
  %v1534 = vadd.s32 %v1530, 1
  %v1535 = vsel %vm1533, %v1534, %v1530
  %v1536 = vadd.s32 %v1531, %v1535
  %v1537 = vadd.s32 %v1536, 536870912
  %v1538 = vshrl.u32 %v1537, 30
  %v1539 = vshll.u32 %v1538, 30
  %v1540 = vsub.s32 %v1536, %v1539
  %vm1541 = vcmp.lt.s32.totalorder %v1540, 0
  %v1542 = vsub.s32 0, %v1540
  %v1543 = vsel %vm1541, %v1542, %v1540
  %v1544 = vclz %v1543
  %v1545 = vsub.s32 %v1544, 2
  %vm1546 = vcmp.gt.s32.totalorder 0, %v1545
  %v1547 = vsel %vm1546, 0, %v1545
  %v1548 = vsub.s32 32, %v1547
  %v1549 = vshll.u32 %v1540, %v1547
  %v1550 = vshrl.u32 %v1532, %v1548
  %v1551 = vor.u32 %v1549, %v1550
  %v1552 = vsub.s32 4294967266, %v1547
  %v1553 = vadd.s32 %v1552, 127
  %v1554 = vshll.u32 %v1553, 23
  %v1555 = vor.u32 4788187, %v1554
  %v1556 = vand.u32 2147483647, %v1555
  %v1558 = vcvt.s32.f32 %v1551
  %v1559 = vmul.f32 %v1558, %v1556
  %v1560 = vxor.u32 %v1559, 2147483648
  %v1561 = vsel %vm1478, %v1560, %v1559
  %v1562 = vsub.s32 4, %v1538
  %v1563 = vsel %vm1478, %v1562, %v1538
  %v1564 = vsel %vm1477, %v1442, %v1561
  %v1565 = vsel %vm1477, 0, %v1563
  %v1566 = vcosq.f32.pop %v1564
  %v1567 = vsinq.f32.pop %v1564
  %vm1568 = vweird.f32 %v1442
  %v1569 = vand.u32 %v1565, 3
  %vm1570 = vcmp.lt.s32.totalorder %v1569, 2
  %vm1571 = vcmp.eq.s32.totalorder %v1569, 0
  %v1572 = vxor.u32 %v1567, 2147483648
  %v1573 = vsel %vm1571, %v1566, %v1572
  %vm1574 = vcmp.eq.s32.totalorder %v1569, 2
  %v1575 = vxor.u32 %v1566, 2147483648
  %v1576 = vsel %vm1574, %v1575, %v1567
  %v1577 = vsel %vm1570, %v1573, %v1576
  %v1578 = vsel %vm1568, nan, %v1577
  %v1579 = vand.u32 2147483647, %v1443
  %vm1580 = vcmp.le.f32.partialorder %v1579, 0.7853982
  %vm1581 = vcmp.lt.s32.totalorder %v1443, 0
  %v1582 = vand.u32 %v1443, 2139095040
  %v1583 = vshrl.u32 %v1582, 23
  %v1584 = vsub.s32 %v1583, 127
  %v1585 = vand.u32 2147483647, %v1443
  %v1586 = vand.u32 %v1585, 8388607
  %v1587 = vor.u32 %v1586, 8388608
  %v1588 = vsub.s32 0, %v1587
  %v1589 = vadd.s32 %v1584, 1
  %vm1590 = vcmp.gt.s32.totalorder %v1589, 0
  %v1591 = vsel %vm1590, %v1589, 0
  %v1592 = vshrl.u32 %v1591, 5
  %v1593 = vand.u32 %v1591, 31
  %v1594 = vsub.s32 32, %v1593
  %v1595 = vshrl.u32 683565275, %v1594
  %v1596 = vshll.u32 683565275, %v1593
  %v1597 = vshrl.u32 2475754826, %v1594
  %v1598 = vor.u32 %v1596, %v1597
  %v1599 = vshll.u32 2475754826, %v1593
  %v1600 = vshrl.u32 2131351028, %v1594
  %v1601 = vor.u32 %v1599, %v1600
  %v1602 = vshll.u32 2131351028, %v1593
  %v1603 = vshrl.u32 2102212464, %v1594
  %v1604 = vor.u32 %v1602, %v1603
  %v1605 = vshll.u32 2102212464, %v1593
  %v1606 = vshrl.u32 920167782, %v1594
  %v1607 = vor.u32 %v1605, %v1606
  %v1608 = vshll.u32 920167782, %v1593
  %v1609 = vshrl.u32 1326507024, %v1594
  %v1610 = vor.u32 %v1608, %v1609
  %vm1611 = vcmp.lt.s32.totalorder %v1592, 1
  %vm1612 = vcmp.lt.s32.totalorder %v1592, 2
  %vm1613 = vcmp.lt.s32.totalorder %v1592, 3
  %vm1614 = vcmp.lt.s32.totalorder %v1592, 4
  %v1615 = vsel %vm1611, %v1595, %v1598
  %v1616 = vsel %vm1614, %v1604, 2102212464
  %v1617 = vsel %vm1613, %v1601, %v1616
  %v1618 = vsel %vm1612, %v1615, %v1617
  %v1619 = vsel %vm1611, %v1598, %v1601
  %v1620 = vsel %vm1614, %v1607, 920167782
  %v1621 = vsel %vm1613, %v1604, %v1620
  %v1622 = vsel %vm1612, %v1619, %v1621
  %v1623 = vsel %vm1611, %v1601, %v1604
  %v1624 = vsel %vm1614, %v1610, 1326507024
  %v1625 = vsel %vm1613, %v1607, %v1624
  %v1626 = vsel %vm1612, %v1623, %v1625
  %v1627 = vshll.u32 %v1587, 8
  %v1628 = vmul.u32.u64.compose %v1627, %v1626
  %v1629 = vextract.low.u32 %v1628
  %v1630 = vextract.high.u32 %v1628
  %v1631 = vmul.u32.u64.compose %v1627, %v1622
  %v1632 = vextract.low.u32 %v1631
  %v1633 = vextract.high.u32 %v1631
  %v1634 = vmul.u32 %v1627, %v1618
  %v1635 = vadd.s32 %v1630, %v1632
  %vm1636 = vc.u32 %v1630, %v1632
  %v1637 = vadd.s32 %v1633, 1
  %v1638 = vsel %vm1636, %v1637, %v1633
  %v1639 = vadd.s32 %v1634, %v1638
  %v1640 = vadd.s32 %v1639, 536870912
  %v1641 = vshrl.u32 %v1640, 30
  %v1642 = vshll.u32 %v1641, 30
  %v1643 = vsub.s32 %v1639, %v1642
  %vm1644 = vcmp.lt.s32.totalorder %v1643, 0
  %v1645 = vsub.s32 0, %v1643
  %v1646 = vsel %vm1644, %v1645, %v1643
  %v1647 = vclz %v1646
  %v1648 = vsub.s32 %v1647, 2
  %vm1649 = vcmp.gt.s32.totalorder 0, %v1648
  %v1650 = vsel %vm1649, 0, %v1648
  %v1651 = vsub.s32 32, %v1650
  %v1652 = vshll.u32 %v1643, %v1650
  %v1653 = vshrl.u32 %v1635, %v1651
  %v1654 = vor.u32 %v1652, %v1653
  %v1655 = vsub.s32 4294967266, %v1650
  %v1656 = vadd.s32 %v1655, 127
  %v1657 = vshll.u32 %v1656, 23
  %v1658 = vor.u32 4788187, %v1657
  %v1659 = vand.u32 2147483647, %v1658
  %v1661 = vcvt.s32.f32 %v1654
  %v1662 = vmul.f32 %v1661, %v1659
  %v1663 = vxor.u32 %v1662, 2147483648
  %v1664 = vsel %vm1581, %v1663, %v1662
  %v1665 = vsub.s32 4, %v1641
  %v1666 = vsel %vm1581, %v1665, %v1641
  %v1667 = vsel %vm1580, %v1443, %v1664
  %v1668 = vsel %vm1580, 0, %v1666
  %v1669 = vcosq.f32.pop %v1667
  %v1670 = vsinq.f32.pop %v1667
  %vm1671 = vweird.f32 %v1443
  %v1672 = vand.u32 %v1668, 3
  %vm1673 = vcmp.lt.s32.totalorder %v1672, 2
  %vm1674 = vcmp.eq.s32.totalorder %v1672, 0
  %v1675 = vxor.u32 %v1670, 2147483648
  %v1676 = vsel %vm1674, %v1669, %v1675
  %vm1677 = vcmp.eq.s32.totalorder %v1672, 2
  %v1678 = vxor.u32 %v1669, 2147483648
  %v1679 = vsel %vm1677, %v1678, %v1670
  %v1680 = vsel %vm1673, %v1676, %v1679
  %v1681 = vsel %vm1671, nan, %v1680
  %v1682 = vand.u32 2147483647, %v1442
  %vm1683 = vcmp.le.f32.partialorder %v1682, 0.7853982
  %vm1684 = vcmp.lt.s32.totalorder %v1442, 0
  %v1685 = vand.u32 %v1442, 2139095040
  %v1686 = vshrl.u32 %v1685, 23
  %v1687 = vsub.s32 %v1686, 127
  %v1688 = vand.u32 2147483647, %v1442
  %v1689 = vand.u32 %v1688, 8388607
  %v1690 = vor.u32 %v1689, 8388608
  %v1691 = vsub.s32 0, %v1690
  %v1692 = vadd.s32 %v1687, 1
  %vm1693 = vcmp.gt.s32.totalorder %v1692, 0
  %v1694 = vsel %vm1693, %v1692, 0
  %v1695 = vshrl.u32 %v1694, 5
  %v1696 = vand.u32 %v1694, 31
  %v1697 = vsub.s32 32, %v1696
  %v1698 = vshrl.u32 683565275, %v1697
  %v1699 = vshll.u32 683565275, %v1696
  %v1700 = vshrl.u32 2475754826, %v1697
  %v1701 = vor.u32 %v1699, %v1700
  %v1702 = vshll.u32 2475754826, %v1696
  %v1703 = vshrl.u32 2131351028, %v1697
  %v1704 = vor.u32 %v1702, %v1703
  %v1705 = vshll.u32 2131351028, %v1696
  %v1706 = vshrl.u32 2102212464, %v1697
  %v1707 = vor.u32 %v1705, %v1706
  %v1708 = vshll.u32 2102212464, %v1696
  %v1709 = vshrl.u32 920167782, %v1697
  %v1710 = vor.u32 %v1708, %v1709
  %v1711 = vshll.u32 920167782, %v1696
  %v1712 = vshrl.u32 1326507024, %v1697
  %v1713 = vor.u32 %v1711, %v1712
  %vm1714 = vcmp.lt.s32.totalorder %v1695, 1
  %vm1715 = vcmp.lt.s32.totalorder %v1695, 2
  %vm1716 = vcmp.lt.s32.totalorder %v1695, 3
  %vm1717 = vcmp.lt.s32.totalorder %v1695, 4
  %v1718 = vsel %vm1714, %v1698, %v1701
  %v1719 = vsel %vm1717, %v1707, 2102212464
  %v1720 = vsel %vm1716, %v1704, %v1719
  %v1721 = vsel %vm1715, %v1718, %v1720
  %v1722 = vsel %vm1714, %v1701, %v1704
  %v1723 = vsel %vm1717, %v1710, 920167782
  %v1724 = vsel %vm1716, %v1707, %v1723
  %v1725 = vsel %vm1715, %v1722, %v1724
  %v1726 = vsel %vm1714, %v1704, %v1707
  %v1727 = vsel %vm1717, %v1713, 1326507024
  %v1728 = vsel %vm1716, %v1710, %v1727
  %v1729 = vsel %vm1715, %v1726, %v1728
  %v1730 = vshll.u32 %v1690, 8
  %v1731 = vmul.u32.u64.compose %v1730, %v1729
  %v1732 = vextract.low.u32 %v1731
  %v1733 = vextract.high.u32 %v1731
  %v1734 = vmul.u32.u64.compose %v1730, %v1725
  %v1735 = vextract.low.u32 %v1734
  %v1736 = vextract.high.u32 %v1734
  %v1737 = vmul.u32 %v1730, %v1721
  %v1738 = vadd.s32 %v1733, %v1735
  %vm1739 = vc.u32 %v1733, %v1735
  %v1740 = vadd.s32 %v1736, 1
  %v1741 = vsel %vm1739, %v1740, %v1736
  %v1742 = vadd.s32 %v1737, %v1741
  %v1743 = vadd.s32 %v1742, 536870912
  %v1744 = vshrl.u32 %v1743, 30
  %v1745 = vshll.u32 %v1744, 30
  %v1746 = vsub.s32 %v1742, %v1745
  %vm1747 = vcmp.lt.s32.totalorder %v1746, 0
  %v1748 = vsub.s32 0, %v1746
  %v1749 = vsel %vm1747, %v1748, %v1746
  %v1750 = vclz %v1749
  %v1751 = vsub.s32 %v1750, 2
  %vm1752 = vcmp.gt.s32.totalorder 0, %v1751
  %v1753 = vsel %vm1752, 0, %v1751
  %v1754 = vsub.s32 32, %v1753
  %v1755 = vshll.u32 %v1746, %v1753
  %v1756 = vshrl.u32 %v1738, %v1754
  %v1757 = vor.u32 %v1755, %v1756
  %v1758 = vsub.s32 4294967266, %v1753
  %v1759 = vadd.s32 %v1758, 127
  %v1760 = vshll.u32 %v1759, 23
  %v1761 = vor.u32 4788187, %v1760
  %v1762 = vand.u32 2147483647, %v1761
  %v1764 = vcvt.s32.f32 %v1757
  %v1765 = vmul.f32 %v1764, %v1762
  %v1766 = vxor.u32 %v1765, 2147483648
  %v1767 = vsel %vm1684, %v1766, %v1765
  %v1768 = vsub.s32 4, %v1744
  %v1769 = vsel %vm1684, %v1768, %v1744
  %v1770 = vsel %vm1683, %v1442, %v1767
  %v1771 = vsel %vm1683, 0, %v1769
  %v1772 = vcosq.f32.pop %v1770
  %v1773 = vsinq.f32.pop %v1770
  %vm1774 = vweird.f32 %v1442
  %v1775 = vadd.s32 %v1771, 3
  %v1776 = vand.u32 %v1775, 3
  %vm1777 = vcmp.lt.s32.totalorder %v1776, 2
  %vm1778 = vcmp.eq.s32.totalorder %v1776, 0
  %v1779 = vxor.u32 %v1773, 2147483648
  %v1780 = vsel %vm1778, %v1772, %v1779
  %vm1781 = vcmp.eq.s32.totalorder %v1776, 2
  %v1782 = vxor.u32 %v1772, 2147483648
  %v1783 = vsel %vm1781, %v1782, %v1773
  %v1784 = vsel %vm1777, %v1780, %v1783
  %v1785 = vsel %vm1774, nan, %v1784
  %v1786 = vand.u32 2147483647, %v1443
  %vm1787 = vcmp.le.f32.partialorder %v1786, 0.7853982
  %vm1788 = vcmp.lt.s32.totalorder %v1443, 0
  %v1789 = vand.u32 %v1443, 2139095040
  %v1790 = vshrl.u32 %v1789, 23
  %v1791 = vsub.s32 %v1790, 127
  %v1792 = vand.u32 2147483647, %v1443
  %v1793 = vand.u32 %v1792, 8388607
  %v1794 = vor.u32 %v1793, 8388608
  %v1795 = vsub.s32 0, %v1794
  %v1796 = vadd.s32 %v1791, 1
  %vm1797 = vcmp.gt.s32.totalorder %v1796, 0
  %v1798 = vsel %vm1797, %v1796, 0
  %v1799 = vshrl.u32 %v1798, 5
  %v1800 = vand.u32 %v1798, 31
  %v1801 = vsub.s32 32, %v1800
  %v1802 = vshrl.u32 683565275, %v1801
  %v1803 = vshll.u32 683565275, %v1800
  %v1804 = vshrl.u32 2475754826, %v1801
  %v1805 = vor.u32 %v1803, %v1804
  %v1806 = vshll.u32 2475754826, %v1800
  %v1807 = vshrl.u32 2131351028, %v1801
  %v1808 = vor.u32 %v1806, %v1807
  %v1809 = vshll.u32 2131351028, %v1800
  %v1810 = vshrl.u32 2102212464, %v1801
  %v1811 = vor.u32 %v1809, %v1810
  %v1812 = vshll.u32 2102212464, %v1800
  %v1813 = vshrl.u32 920167782, %v1801
  %v1814 = vor.u32 %v1812, %v1813
  %v1815 = vshll.u32 920167782, %v1800
  %v1816 = vshrl.u32 1326507024, %v1801
  %v1817 = vor.u32 %v1815, %v1816
  %vm1818 = vcmp.lt.s32.totalorder %v1799, 1
  %vm1819 = vcmp.lt.s32.totalorder %v1799, 2
  %vm1820 = vcmp.lt.s32.totalorder %v1799, 3
  %vm1821 = vcmp.lt.s32.totalorder %v1799, 4
  %v1822 = vsel %vm1818, %v1802, %v1805
  %v1823 = vsel %vm1821, %v1811, 2102212464
  %v1824 = vsel %vm1820, %v1808, %v1823
  %v1825 = vsel %vm1819, %v1822, %v1824
  %v1826 = vsel %vm1818, %v1805, %v1808
  %v1827 = vsel %vm1821, %v1814, 920167782
  %v1828 = vsel %vm1820, %v1811, %v1827
  %v1829 = vsel %vm1819, %v1826, %v1828
  %v1830 = vsel %vm1818, %v1808, %v1811
  %v1831 = vsel %vm1821, %v1817, 1326507024
  %v1832 = vsel %vm1820, %v1814, %v1831
  %v1833 = vsel %vm1819, %v1830, %v1832
  %v1834 = vshll.u32 %v1794, 8
  %v1835 = vmul.u32.u64.compose %v1834, %v1833
  %v1836 = vextract.low.u32 %v1835
  %v1837 = vextract.high.u32 %v1835
  %v1838 = vmul.u32.u64.compose %v1834, %v1829
  %v1839 = vextract.low.u32 %v1838
  %v1840 = vextract.high.u32 %v1838
  %v1841 = vmul.u32 %v1834, %v1825
  %v1842 = vadd.s32 %v1837, %v1839
  %vm1843 = vc.u32 %v1837, %v1839
  %v1844 = vadd.s32 %v1840, 1
  %v1845 = vsel %vm1843, %v1844, %v1840
  %v1846 = vadd.s32 %v1841, %v1845
  %v1847 = vadd.s32 %v1846, 536870912
  %v1848 = vshrl.u32 %v1847, 30
  %v1849 = vshll.u32 %v1848, 30
  %v1850 = vsub.s32 %v1846, %v1849
  %vm1851 = vcmp.lt.s32.totalorder %v1850, 0
  %v1852 = vsub.s32 0, %v1850
  %v1853 = vsel %vm1851, %v1852, %v1850
  %v1854 = vclz %v1853
  %v1855 = vsub.s32 %v1854, 2
  %vm1856 = vcmp.gt.s32.totalorder 0, %v1855
  %v1857 = vsel %vm1856, 0, %v1855
  %v1858 = vsub.s32 32, %v1857
  %v1859 = vshll.u32 %v1850, %v1857
  %v1860 = vshrl.u32 %v1842, %v1858
  %v1861 = vor.u32 %v1859, %v1860
  %v1862 = vsub.s32 4294967266, %v1857
  %v1863 = vadd.s32 %v1862, 127
  %v1864 = vshll.u32 %v1863, 23
  %v1865 = vor.u32 4788187, %v1864
  %v1866 = vand.u32 2147483647, %v1865
  %v1868 = vcvt.s32.f32 %v1861
  %v1869 = vmul.f32 %v1868, %v1866
  %v1870 = vxor.u32 %v1869, 2147483648
  %v1871 = vsel %vm1788, %v1870, %v1869
  %v1872 = vsub.s32 4, %v1848
  %v1873 = vsel %vm1788, %v1872, %v1848
  %v1874 = vsel %vm1787, %v1443, %v1871
  %v1875 = vsel %vm1787, 0, %v1873
  %v1876 = vcosq.f32.pop %v1874
  %v1877 = vsinq.f32.pop %v1874
  %vm1878 = vweird.f32 %v1443
  %v1879 = vadd.s32 %v1875, 3
  %v1880 = vand.u32 %v1879, 3
  %vm1881 = vcmp.lt.s32.totalorder %v1880, 2
  %vm1882 = vcmp.eq.s32.totalorder %v1880, 0
  %v1883 = vxor.u32 %v1877, 2147483648
  %v1884 = vsel %vm1882, %v1876, %v1883
  %vm1885 = vcmp.eq.s32.totalorder %v1880, 2
  %v1886 = vxor.u32 %v1876, 2147483648
  %v1887 = vsel %vm1885, %v1886, %v1877
  %v1888 = vsel %vm1881, %v1884, %v1887
  %v1889 = vsel %vm1878, nan, %v1888
  %v1890 = vand.u32 2147483647, %v1458
  %vm1891 = vcmp.le.f32.partialorder %v1890, 0.7853982
  %vm1892 = vcmp.lt.s32.totalorder %v1458, 0
  %v1893 = vand.u32 %v1458, 2139095040
  %v1894 = vshrl.u32 %v1893, 23
  %v1895 = vsub.s32 %v1894, 127
  %v1896 = vand.u32 2147483647, %v1458
  %v1897 = vand.u32 %v1896, 8388607
  %v1898 = vor.u32 %v1897, 8388608
  %v1899 = vsub.s32 0, %v1898
  %v1900 = vadd.s32 %v1895, 1
  %vm1901 = vcmp.gt.s32.totalorder %v1900, 0
  %v1902 = vsel %vm1901, %v1900, 0
  %v1903 = vshrl.u32 %v1902, 5
  %v1904 = vand.u32 %v1902, 31
  %v1905 = vsub.s32 32, %v1904
  %v1906 = vshrl.u32 683565275, %v1905
  %v1907 = vshll.u32 683565275, %v1904
  %v1908 = vshrl.u32 2475754826, %v1905
  %v1909 = vor.u32 %v1907, %v1908
  %v1910 = vshll.u32 2475754826, %v1904
  %v1911 = vshrl.u32 2131351028, %v1905
  %v1912 = vor.u32 %v1910, %v1911
  %v1913 = vshll.u32 2131351028, %v1904
  %v1914 = vshrl.u32 2102212464, %v1905
  %v1915 = vor.u32 %v1913, %v1914
  %v1916 = vshll.u32 2102212464, %v1904
  %v1917 = vshrl.u32 920167782, %v1905
  %v1918 = vor.u32 %v1916, %v1917
  %v1919 = vshll.u32 920167782, %v1904
  %v1920 = vshrl.u32 1326507024, %v1905
  %v1921 = vor.u32 %v1919, %v1920
  %vm1922 = vcmp.lt.s32.totalorder %v1903, 1
  %vm1923 = vcmp.lt.s32.totalorder %v1903, 2
  %vm1924 = vcmp.lt.s32.totalorder %v1903, 3
  %vm1925 = vcmp.lt.s32.totalorder %v1903, 4
  %v1926 = vsel %vm1922, %v1906, %v1909
  %v1927 = vsel %vm1925, %v1915, 2102212464
  %v1928 = vsel %vm1924, %v1912, %v1927
  %v1929 = vsel %vm1923, %v1926, %v1928
  %v1930 = vsel %vm1922, %v1909, %v1912
  %v1931 = vsel %vm1925, %v1918, 920167782
  %v1932 = vsel %vm1924, %v1915, %v1931
  %v1933 = vsel %vm1923, %v1930, %v1932
  %v1934 = vsel %vm1922, %v1912, %v1915
  %v1935 = vsel %vm1925, %v1921, 1326507024
  %v1936 = vsel %vm1924, %v1918, %v1935
  %v1937 = vsel %vm1923, %v1934, %v1936
  %v1938 = vshll.u32 %v1898, 8
  %v1939 = vmul.u32.u64.compose %v1938, %v1937
  %v1940 = vextract.low.u32 %v1939
  %v1941 = vextract.high.u32 %v1939
  %v1942 = vmul.u32.u64.compose %v1938, %v1933
  %v1943 = vextract.low.u32 %v1942
  %v1944 = vextract.high.u32 %v1942
  %v1945 = vmul.u32 %v1938, %v1929
  %v1946 = vadd.s32 %v1941, %v1943
  %vm1947 = vc.u32 %v1941, %v1943
  %v1948 = vadd.s32 %v1944, 1
  %v1949 = vsel %vm1947, %v1948, %v1944
  %v1950 = vadd.s32 %v1945, %v1949
  %v1951 = vadd.s32 %v1950, 536870912
  %v1952 = vshrl.u32 %v1951, 30
  %v1953 = vshll.u32 %v1952, 30
  %v1954 = vsub.s32 %v1950, %v1953
  %vm1955 = vcmp.lt.s32.totalorder %v1954, 0
  %v1956 = vsub.s32 0, %v1954
  %v1957 = vsel %vm1955, %v1956, %v1954
  %v1958 = vclz %v1957
  %v1959 = vsub.s32 %v1958, 2
  %vm1960 = vcmp.gt.s32.totalorder 0, %v1959
  %v1961 = vsel %vm1960, 0, %v1959
  %v1962 = vsub.s32 32, %v1961
  %v1963 = vshll.u32 %v1954, %v1961
  %v1964 = vshrl.u32 %v1946, %v1962
  %v1965 = vor.u32 %v1963, %v1964
  %v1966 = vsub.s32 4294967266, %v1961
  %v1967 = vadd.s32 %v1966, 127
  %v1968 = vshll.u32 %v1967, 23
  %v1969 = vor.u32 4788187, %v1968
  %v1970 = vand.u32 2147483647, %v1969
  %v1972 = vcvt.s32.f32 %v1965
  %v1973 = vmul.f32 %v1972, %v1970
  %v1974 = vxor.u32 %v1973, 2147483648
  %v1975 = vsel %vm1892, %v1974, %v1973
  %v1976 = vsub.s32 4, %v1952
  %v1977 = vsel %vm1892, %v1976, %v1952
  %v1978 = vsel %vm1891, %v1458, %v1975
  %v1979 = vsel %vm1891, 0, %v1977
  %v1980 = vcosq.f32.pop %v1978
  %v1981 = vsinq.f32.pop %v1978
  %vm1982 = vweird.f32 %v1458
  %v1983 = vand.u32 %v1979, 3
  %vm1984 = vcmp.lt.s32.totalorder %v1983, 2
  %vm1985 = vcmp.eq.s32.totalorder %v1983, 0
  %v1986 = vxor.u32 %v1981, 2147483648
  %v1987 = vsel %vm1985, %v1980, %v1986
  %vm1988 = vcmp.eq.s32.totalorder %v1983, 2
  %v1989 = vxor.u32 %v1980, 2147483648
  %v1990 = vsel %vm1988, %v1989, %v1981
  %v1991 = vsel %vm1984, %v1987, %v1990
  %v1992 = vsel %vm1982, nan, %v1991
  %v1993 = vand.u32 2147483647, %v1459
  %vm1994 = vcmp.le.f32.partialorder %v1993, 0.7853982
  %vm1995 = vcmp.lt.s32.totalorder %v1459, 0
  %v1996 = vand.u32 %v1459, 2139095040
  %v1997 = vshrl.u32 %v1996, 23
  %v1998 = vsub.s32 %v1997, 127
  %v1999 = vand.u32 2147483647, %v1459
  %v2000 = vand.u32 %v1999, 8388607
  %v2001 = vor.u32 %v2000, 8388608
  %v2002 = vsub.s32 0, %v2001
  %v2003 = vadd.s32 %v1998, 1
  %vm2004 = vcmp.gt.s32.totalorder %v2003, 0
  %v2005 = vsel %vm2004, %v2003, 0
  %v2006 = vshrl.u32 %v2005, 5
  %v2007 = vand.u32 %v2005, 31
  %v2008 = vsub.s32 32, %v2007
  %v2009 = vshrl.u32 683565275, %v2008
  %v2010 = vshll.u32 683565275, %v2007
  %v2011 = vshrl.u32 2475754826, %v2008
  %v2012 = vor.u32 %v2010, %v2011
  %v2013 = vshll.u32 2475754826, %v2007
  %v2014 = vshrl.u32 2131351028, %v2008
  %v2015 = vor.u32 %v2013, %v2014
  %v2016 = vshll.u32 2131351028, %v2007
  %v2017 = vshrl.u32 2102212464, %v2008
  %v2018 = vor.u32 %v2016, %v2017
  %v2019 = vshll.u32 2102212464, %v2007
  %v2020 = vshrl.u32 920167782, %v2008
  %v2021 = vor.u32 %v2019, %v2020
  %v2022 = vshll.u32 920167782, %v2007
  %v2023 = vshrl.u32 1326507024, %v2008
  %v2024 = vor.u32 %v2022, %v2023
  %vm2025 = vcmp.lt.s32.totalorder %v2006, 1
  %vm2026 = vcmp.lt.s32.totalorder %v2006, 2
  %vm2027 = vcmp.lt.s32.totalorder %v2006, 3
  %vm2028 = vcmp.lt.s32.totalorder %v2006, 4
  %v2029 = vsel %vm2025, %v2009, %v2012
  %v2030 = vsel %vm2028, %v2018, 2102212464
  %v2031 = vsel %vm2027, %v2015, %v2030
  %v2032 = vsel %vm2026, %v2029, %v2031
  %v2033 = vsel %vm2025, %v2012, %v2015
  %v2034 = vsel %vm2028, %v2021, 920167782
  %v2035 = vsel %vm2027, %v2018, %v2034
  %v2036 = vsel %vm2026, %v2033, %v2035
  %v2037 = vsel %vm2025, %v2015, %v2018
  %v2038 = vsel %vm2028, %v2024, 1326507024
  %v2039 = vsel %vm2027, %v2021, %v2038
  %v2040 = vsel %vm2026, %v2037, %v2039
  %v2041 = vshll.u32 %v2001, 8
  %v2042 = vmul.u32.u64.compose %v2041, %v2040
  %v2043 = vextract.low.u32 %v2042
  %v2044 = vextract.high.u32 %v2042
  %v2045 = vmul.u32.u64.compose %v2041, %v2036
  %v2046 = vextract.low.u32 %v2045
  %v2047 = vextract.high.u32 %v2045
  %v2048 = vmul.u32 %v2041, %v2032
  %v2049 = vadd.s32 %v2044, %v2046
  %vm2050 = vc.u32 %v2044, %v2046
  %v2051 = vadd.s32 %v2047, 1
  %v2052 = vsel %vm2050, %v2051, %v2047
  %v2053 = vadd.s32 %v2048, %v2052
  %v2054 = vadd.s32 %v2053, 536870912
  %v2055 = vshrl.u32 %v2054, 30
  %v2056 = vshll.u32 %v2055, 30
  %v2057 = vsub.s32 %v2053, %v2056
  %vm2058 = vcmp.lt.s32.totalorder %v2057, 0
  %v2059 = vsub.s32 0, %v2057
  %v2060 = vsel %vm2058, %v2059, %v2057
  %v2061 = vclz %v2060
  %v2062 = vsub.s32 %v2061, 2
  %vm2063 = vcmp.gt.s32.totalorder 0, %v2062
  %v2064 = vsel %vm2063, 0, %v2062
  %v2065 = vsub.s32 32, %v2064
  %v2066 = vshll.u32 %v2057, %v2064
  %v2067 = vshrl.u32 %v2049, %v2065
  %v2068 = vor.u32 %v2066, %v2067
  %v2069 = vsub.s32 4294967266, %v2064
  %v2070 = vadd.s32 %v2069, 127
  %v2071 = vshll.u32 %v2070, 23
  %v2072 = vor.u32 4788187, %v2071
  %v2073 = vand.u32 2147483647, %v2072
  %v2075 = vcvt.s32.f32 %v2068
  %v2076 = vmul.f32 %v2075, %v2073
  %v2077 = vxor.u32 %v2076, 2147483648
  %v2078 = vsel %vm1995, %v2077, %v2076
  %v2079 = vsub.s32 4, %v2055
  %v2080 = vsel %vm1995, %v2079, %v2055
  %v2081 = vsel %vm1994, %v1459, %v2078
  %v2082 = vsel %vm1994, 0, %v2080
  %v2083 = vcosq.f32.pop %v2081
  %v2084 = vsinq.f32.pop %v2081
  %vm2085 = vweird.f32 %v1459
  %v2086 = vand.u32 %v2082, 3
  %vm2087 = vcmp.lt.s32.totalorder %v2086, 2
  %vm2088 = vcmp.eq.s32.totalorder %v2086, 0
  %v2089 = vxor.u32 %v2084, 2147483648
  %v2090 = vsel %vm2088, %v2083, %v2089
  %vm2091 = vcmp.eq.s32.totalorder %v2086, 2
  %v2092 = vxor.u32 %v2083, 2147483648
  %v2093 = vsel %vm2091, %v2092, %v2084
  %v2094 = vsel %vm2087, %v2090, %v2093
  %v2095 = vsel %vm2085, nan, %v2094
  %v2096 = vand.u32 2147483647, %v1458
  %vm2097 = vcmp.le.f32.partialorder %v2096, 0.7853982
  %vm2098 = vcmp.lt.s32.totalorder %v1458, 0
  %v2099 = vand.u32 %v1458, 2139095040
  %v2100 = vshrl.u32 %v2099, 23
  %v2101 = vsub.s32 %v2100, 127
  %v2102 = vand.u32 2147483647, %v1458
  %v2103 = vand.u32 %v2102, 8388607
  %v2104 = vor.u32 %v2103, 8388608
  %v2105 = vsub.s32 0, %v2104
  %v2106 = vadd.s32 %v2101, 1
  %vm2107 = vcmp.gt.s32.totalorder %v2106, 0
  %v2108 = vsel %vm2107, %v2106, 0
  %v2109 = vshrl.u32 %v2108, 5
  %v2110 = vand.u32 %v2108, 31
  %v2111 = vsub.s32 32, %v2110
  %v2112 = vshrl.u32 683565275, %v2111
  %v2113 = vshll.u32 683565275, %v2110
  %v2114 = vshrl.u32 2475754826, %v2111
  %v2115 = vor.u32 %v2113, %v2114
  %v2116 = vshll.u32 2475754826, %v2110
  %v2117 = vshrl.u32 2131351028, %v2111
  %v2118 = vor.u32 %v2116, %v2117
  %v2119 = vshll.u32 2131351028, %v2110
  %v2120 = vshrl.u32 2102212464, %v2111
  %v2121 = vor.u32 %v2119, %v2120
  %v2122 = vshll.u32 2102212464, %v2110
  %v2123 = vshrl.u32 920167782, %v2111
  %v2124 = vor.u32 %v2122, %v2123
  %v2125 = vshll.u32 920167782, %v2110
  %v2126 = vshrl.u32 1326507024, %v2111
  %v2127 = vor.u32 %v2125, %v2126
  %vm2128 = vcmp.lt.s32.totalorder %v2109, 1
  %vm2129 = vcmp.lt.s32.totalorder %v2109, 2
  %vm2130 = vcmp.lt.s32.totalorder %v2109, 3
  %vm2131 = vcmp.lt.s32.totalorder %v2109, 4
  %v2132 = vsel %vm2128, %v2112, %v2115
  %v2133 = vsel %vm2131, %v2121, 2102212464
  %v2134 = vsel %vm2130, %v2118, %v2133
  %v2135 = vsel %vm2129, %v2132, %v2134
  %v2136 = vsel %vm2128, %v2115, %v2118
  %v2137 = vsel %vm2131, %v2124, 920167782
  %v2138 = vsel %vm2130, %v2121, %v2137
  %v2139 = vsel %vm2129, %v2136, %v2138
  %v2140 = vsel %vm2128, %v2118, %v2121
  %v2141 = vsel %vm2131, %v2127, 1326507024
  %v2142 = vsel %vm2130, %v2124, %v2141
  %v2143 = vsel %vm2129, %v2140, %v2142
  %v2144 = vshll.u32 %v2104, 8
  %v2145 = vmul.u32.u64.compose %v2144, %v2143
  %v2146 = vextract.low.u32 %v2145
  %v2147 = vextract.high.u32 %v2145
  %v2148 = vmul.u32.u64.compose %v2144, %v2139
  %v2149 = vextract.low.u32 %v2148
  %v2150 = vextract.high.u32 %v2148
  %v2151 = vmul.u32 %v2144, %v2135
  %v2152 = vadd.s32 %v2147, %v2149
  %vm2153 = vc.u32 %v2147, %v2149
  %v2154 = vadd.s32 %v2150, 1
  %v2155 = vsel %vm2153, %v2154, %v2150
  %v2156 = vadd.s32 %v2151, %v2155
  %v2157 = vadd.s32 %v2156, 536870912
  %v2158 = vshrl.u32 %v2157, 30
  %v2159 = vshll.u32 %v2158, 30
  %v2160 = vsub.s32 %v2156, %v2159
  %vm2161 = vcmp.lt.s32.totalorder %v2160, 0
  %v2162 = vsub.s32 0, %v2160
  %v2163 = vsel %vm2161, %v2162, %v2160
  %v2164 = vclz %v2163
  %v2165 = vsub.s32 %v2164, 2
  %vm2166 = vcmp.gt.s32.totalorder 0, %v2165
  %v2167 = vsel %vm2166, 0, %v2165
  %v2168 = vsub.s32 32, %v2167
  %v2169 = vshll.u32 %v2160, %v2167
  %v2170 = vshrl.u32 %v2152, %v2168
  %v2171 = vor.u32 %v2169, %v2170
  %v2172 = vsub.s32 4294967266, %v2167
  %v2173 = vadd.s32 %v2172, 127
  %v2174 = vshll.u32 %v2173, 23
  %v2175 = vor.u32 4788187, %v2174
  %v2176 = vand.u32 2147483647, %v2175
  %v2178 = vcvt.s32.f32 %v2171
  %v2179 = vmul.f32 %v2178, %v2176
  %v2180 = vxor.u32 %v2179, 2147483648
  %v2181 = vsel %vm2098, %v2180, %v2179
  %v2182 = vsub.s32 4, %v2158
  %v2183 = vsel %vm2098, %v2182, %v2158
  %v2184 = vsel %vm2097, %v1458, %v2181
  %v2185 = vsel %vm2097, 0, %v2183
  %v2186 = vcosq.f32.pop %v2184
  %v2187 = vsinq.f32.pop %v2184
  %vm2188 = vweird.f32 %v1458
  %v2189 = vadd.s32 %v2185, 3
  %v2190 = vand.u32 %v2189, 3
  %vm2191 = vcmp.lt.s32.totalorder %v2190, 2
  %vm2192 = vcmp.eq.s32.totalorder %v2190, 0
  %v2193 = vxor.u32 %v2187, 2147483648
  %v2194 = vsel %vm2192, %v2186, %v2193
  %vm2195 = vcmp.eq.s32.totalorder %v2190, 2
  %v2196 = vxor.u32 %v2186, 2147483648
  %v2197 = vsel %vm2195, %v2196, %v2187
  %v2198 = vsel %vm2191, %v2194, %v2197
  %v2199 = vsel %vm2188, nan, %v2198
  %v2200 = vand.u32 2147483647, %v1459
  %vm2201 = vcmp.le.f32.partialorder %v2200, 0.7853982
  %vm2202 = vcmp.lt.s32.totalorder %v1459, 0
  %v2203 = vand.u32 %v1459, 2139095040
  %v2204 = vshrl.u32 %v2203, 23
  %v2205 = vsub.s32 %v2204, 127
  %v2206 = vand.u32 2147483647, %v1459
  %v2207 = vand.u32 %v2206, 8388607
  %v2208 = vor.u32 %v2207, 8388608
  %v2209 = vsub.s32 0, %v2208
  %v2210 = vadd.s32 %v2205, 1
  %vm2211 = vcmp.gt.s32.totalorder %v2210, 0
  %v2212 = vsel %vm2211, %v2210, 0
  %v2213 = vshrl.u32 %v2212, 5
  %v2214 = vand.u32 %v2212, 31
  %v2215 = vsub.s32 32, %v2214
  %v2216 = vshrl.u32 683565275, %v2215
  %v2217 = vshll.u32 683565275, %v2214
  %v2218 = vshrl.u32 2475754826, %v2215
  %v2219 = vor.u32 %v2217, %v2218
  %v2220 = vshll.u32 2475754826, %v2214
  %v2221 = vshrl.u32 2131351028, %v2215
  %v2222 = vor.u32 %v2220, %v2221
  %v2223 = vshll.u32 2131351028, %v2214
  %v2224 = vshrl.u32 2102212464, %v2215
  %v2225 = vor.u32 %v2223, %v2224
  %v2226 = vshll.u32 2102212464, %v2214
  %v2227 = vshrl.u32 920167782, %v2215
  %v2228 = vor.u32 %v2226, %v2227
  %v2229 = vshll.u32 920167782, %v2214
  %v2230 = vshrl.u32 1326507024, %v2215
  %v2231 = vor.u32 %v2229, %v2230
  %vm2232 = vcmp.lt.s32.totalorder %v2213, 1
  %vm2233 = vcmp.lt.s32.totalorder %v2213, 2
  %vm2234 = vcmp.lt.s32.totalorder %v2213, 3
  %vm2235 = vcmp.lt.s32.totalorder %v2213, 4
  %v2236 = vsel %vm2232, %v2216, %v2219
  %v2237 = vsel %vm2235, %v2225, 2102212464
  %v2238 = vsel %vm2234, %v2222, %v2237
  %v2239 = vsel %vm2233, %v2236, %v2238
  %v2240 = vsel %vm2232, %v2219, %v2222
  %v2241 = vsel %vm2235, %v2228, 920167782
  %v2242 = vsel %vm2234, %v2225, %v2241
  %v2243 = vsel %vm2233, %v2240, %v2242
  %v2244 = vsel %vm2232, %v2222, %v2225
  %v2245 = vsel %vm2235, %v2231, 1326507024
  %v2246 = vsel %vm2234, %v2228, %v2245
  %v2247 = vsel %vm2233, %v2244, %v2246
  %v2248 = vshll.u32 %v2208, 8
  %v2249 = vmul.u32.u64.compose %v2248, %v2247
  %v2250 = vextract.low.u32 %v2249
  %v2251 = vextract.high.u32 %v2249
  %v2252 = vmul.u32.u64.compose %v2248, %v2243
  %v2253 = vextract.low.u32 %v2252
  %v2254 = vextract.high.u32 %v2252
  %v2255 = vmul.u32 %v2248, %v2239
  %v2256 = vadd.s32 %v2251, %v2253
  %vm2257 = vc.u32 %v2251, %v2253
  %v2258 = vadd.s32 %v2254, 1
  %v2259 = vsel %vm2257, %v2258, %v2254
  %v2260 = vadd.s32 %v2255, %v2259
  %v2261 = vadd.s32 %v2260, 536870912
  %v2262 = vshrl.u32 %v2261, 30
  %v2263 = vshll.u32 %v2262, 30
  %v2264 = vsub.s32 %v2260, %v2263
  %vm2265 = vcmp.lt.s32.totalorder %v2264, 0
  %v2266 = vsub.s32 0, %v2264
  %v2267 = vsel %vm2265, %v2266, %v2264
  %v2268 = vclz %v2267
  %v2269 = vsub.s32 %v2268, 2
  %vm2270 = vcmp.gt.s32.totalorder 0, %v2269
  %v2271 = vsel %vm2270, 0, %v2269
  %v2272 = vsub.s32 32, %v2271
  %v2273 = vshll.u32 %v2264, %v2271
  %v2274 = vshrl.u32 %v2256, %v2272
  %v2275 = vor.u32 %v2273, %v2274
  %v2276 = vsub.s32 4294967266, %v2271
  %v2277 = vadd.s32 %v2276, 127
  %v2278 = vshll.u32 %v2277, 23
  %v2279 = vor.u32 4788187, %v2278
  %v2280 = vand.u32 2147483647, %v2279
  %v2282 = vcvt.s32.f32 %v2275
  %v2283 = vmul.f32 %v2282, %v2280
  %v2284 = vxor.u32 %v2283, 2147483648
  %v2285 = vsel %vm2202, %v2284, %v2283
  %v2286 = vsub.s32 4, %v2262
  %v2287 = vsel %vm2202, %v2286, %v2262
  %v2288 = vsel %vm2201, %v1459, %v2285
  %v2289 = vsel %vm2201, 0, %v2287
  %v2290 = vcosq.f32.pop %v2288
  %v2291 = vsinq.f32.pop %v2288
  %vm2292 = vweird.f32 %v1459
  %v2293 = vadd.s32 %v2289, 3
  %v2294 = vand.u32 %v2293, 3
  %vm2295 = vcmp.lt.s32.totalorder %v2294, 2
  %vm2296 = vcmp.eq.s32.totalorder %v2294, 0
  %v2297 = vxor.u32 %v2291, 2147483648
  %v2298 = vsel %vm2296, %v2290, %v2297
  %vm2299 = vcmp.eq.s32.totalorder %v2294, 2
  %v2300 = vxor.u32 %v2290, 2147483648
  %v2301 = vsel %vm2299, %v2300, %v2291
  %v2302 = vsel %vm2295, %v2298, %v2301
  %v2303 = vsel %vm2292, nan, %v2302
  %v2304 = vand.u32 2147483647, %v1474
  %vm2305 = vcmp.le.f32.partialorder %v2304, 0.7853982
  %vm2306 = vcmp.lt.s32.totalorder %v1474, 0
  %v2307 = vand.u32 %v1474, 2139095040
  %v2308 = vshrl.u32 %v2307, 23
  %v2309 = vsub.s32 %v2308, 127
  %v2310 = vand.u32 2147483647, %v1474
  %v2311 = vand.u32 %v2310, 8388607
  %v2312 = vor.u32 %v2311, 8388608
  %v2313 = vsub.s32 0, %v2312
  %v2314 = vadd.s32 %v2309, 1
  %vm2315 = vcmp.gt.s32.totalorder %v2314, 0
  %v2316 = vsel %vm2315, %v2314, 0
  %v2317 = vshrl.u32 %v2316, 5
  %v2318 = vand.u32 %v2316, 31
  %v2319 = vsub.s32 32, %v2318
  %v2320 = vshrl.u32 683565275, %v2319
  %v2321 = vshll.u32 683565275, %v2318
  %v2322 = vshrl.u32 2475754826, %v2319
  %v2323 = vor.u32 %v2321, %v2322
  %v2324 = vshll.u32 2475754826, %v2318
  %v2325 = vshrl.u32 2131351028, %v2319
  %v2326 = vor.u32 %v2324, %v2325
  %v2327 = vshll.u32 2131351028, %v2318
  %v2328 = vshrl.u32 2102212464, %v2319
  %v2329 = vor.u32 %v2327, %v2328
  %v2330 = vshll.u32 2102212464, %v2318
  %v2331 = vshrl.u32 920167782, %v2319
  %v2332 = vor.u32 %v2330, %v2331
  %v2333 = vshll.u32 920167782, %v2318
  %v2334 = vshrl.u32 1326507024, %v2319
  %v2335 = vor.u32 %v2333, %v2334
  %vm2336 = vcmp.lt.s32.totalorder %v2317, 1
  %vm2337 = vcmp.lt.s32.totalorder %v2317, 2
  %vm2338 = vcmp.lt.s32.totalorder %v2317, 3
  %vm2339 = vcmp.lt.s32.totalorder %v2317, 4
  %v2340 = vsel %vm2336, %v2320, %v2323
  %v2341 = vsel %vm2339, %v2329, 2102212464
  %v2342 = vsel %vm2338, %v2326, %v2341
  %v2343 = vsel %vm2337, %v2340, %v2342
  %v2344 = vsel %vm2336, %v2323, %v2326
  %v2345 = vsel %vm2339, %v2332, 920167782
  %v2346 = vsel %vm2338, %v2329, %v2345
  %v2347 = vsel %vm2337, %v2344, %v2346
  %v2348 = vsel %vm2336, %v2326, %v2329
  %v2349 = vsel %vm2339, %v2335, 1326507024
  %v2350 = vsel %vm2338, %v2332, %v2349
  %v2351 = vsel %vm2337, %v2348, %v2350
  %v2352 = vshll.u32 %v2312, 8
  %v2353 = vmul.u32.u64.compose %v2352, %v2351
  %v2354 = vextract.low.u32 %v2353
  %v2355 = vextract.high.u32 %v2353
  %v2356 = vmul.u32.u64.compose %v2352, %v2347
  %v2357 = vextract.low.u32 %v2356
  %v2358 = vextract.high.u32 %v2356
  %v2359 = vmul.u32 %v2352, %v2343
  %v2360 = vadd.s32 %v2355, %v2357
  %vm2361 = vc.u32 %v2355, %v2357
  %v2362 = vadd.s32 %v2358, 1
  %v2363 = vsel %vm2361, %v2362, %v2358
  %v2364 = vadd.s32 %v2359, %v2363
  %v2365 = vadd.s32 %v2364, 536870912
  %v2366 = vshrl.u32 %v2365, 30
  %v2367 = vshll.u32 %v2366, 30
  %v2368 = vsub.s32 %v2364, %v2367
  %vm2369 = vcmp.lt.s32.totalorder %v2368, 0
  %v2370 = vsub.s32 0, %v2368
  %v2371 = vsel %vm2369, %v2370, %v2368
  %v2372 = vclz %v2371
  %v2373 = vsub.s32 %v2372, 2
  %vm2374 = vcmp.gt.s32.totalorder 0, %v2373
  %v2375 = vsel %vm2374, 0, %v2373
  %v2376 = vsub.s32 32, %v2375
  %v2377 = vshll.u32 %v2368, %v2375
  %v2378 = vshrl.u32 %v2360, %v2376
  %v2379 = vor.u32 %v2377, %v2378
  %v2380 = vsub.s32 4294967266, %v2375
  %v2381 = vadd.s32 %v2380, 127
  %v2382 = vshll.u32 %v2381, 23
  %v2383 = vor.u32 4788187, %v2382
  %v2384 = vand.u32 2147483647, %v2383
  %v2386 = vcvt.s32.f32 %v2379
  %v2387 = vmul.f32 %v2386, %v2384
  %v2388 = vxor.u32 %v2387, 2147483648
  %v2389 = vsel %vm2306, %v2388, %v2387
  %v2390 = vsub.s32 4, %v2366
  %v2391 = vsel %vm2306, %v2390, %v2366
  %v2392 = vsel %vm2305, %v1474, %v2389
  %v2393 = vsel %vm2305, 0, %v2391
  %v2394 = vcosq.f32.pop %v2392
  %v2395 = vsinq.f32.pop %v2392
  %vm2396 = vweird.f32 %v1474
  %v2397 = vand.u32 %v2393, 3
  %vm2398 = vcmp.lt.s32.totalorder %v2397, 2
  %vm2399 = vcmp.eq.s32.totalorder %v2397, 0
  %v2400 = vxor.u32 %v2395, 2147483648
  %v2401 = vsel %vm2399, %v2394, %v2400
  %vm2402 = vcmp.eq.s32.totalorder %v2397, 2
  %v2403 = vxor.u32 %v2394, 2147483648
  %v2404 = vsel %vm2402, %v2403, %v2395
  %v2405 = vsel %vm2398, %v2401, %v2404
  %v2406 = vsel %vm2396, nan, %v2405
  %v2407 = vand.u32 2147483647, %v1475
  %vm2408 = vcmp.le.f32.partialorder %v2407, 0.7853982
  %vm2409 = vcmp.lt.s32.totalorder %v1475, 0
  %v2410 = vand.u32 %v1475, 2139095040
  %v2411 = vshrl.u32 %v2410, 23
  %v2412 = vsub.s32 %v2411, 127
  %v2413 = vand.u32 2147483647, %v1475
  %v2414 = vand.u32 %v2413, 8388607
  %v2415 = vor.u32 %v2414, 8388608
  %v2416 = vsub.s32 0, %v2415
  %v2417 = vadd.s32 %v2412, 1
  %vm2418 = vcmp.gt.s32.totalorder %v2417, 0
  %v2419 = vsel %vm2418, %v2417, 0
  %v2420 = vshrl.u32 %v2419, 5
  %v2421 = vand.u32 %v2419, 31
  %v2422 = vsub.s32 32, %v2421
  %v2423 = vshrl.u32 683565275, %v2422
  %v2424 = vshll.u32 683565275, %v2421
  %v2425 = vshrl.u32 2475754826, %v2422
  %v2426 = vor.u32 %v2424, %v2425
  %v2427 = vshll.u32 2475754826, %v2421
  %v2428 = vshrl.u32 2131351028, %v2422
  %v2429 = vor.u32 %v2427, %v2428
  %v2430 = vshll.u32 2131351028, %v2421
  %v2431 = vshrl.u32 2102212464, %v2422
  %v2432 = vor.u32 %v2430, %v2431
  %v2433 = vshll.u32 2102212464, %v2421
  %v2434 = vshrl.u32 920167782, %v2422
  %v2435 = vor.u32 %v2433, %v2434
  %v2436 = vshll.u32 920167782, %v2421
  %v2437 = vshrl.u32 1326507024, %v2422
  %v2438 = vor.u32 %v2436, %v2437
  %vm2439 = vcmp.lt.s32.totalorder %v2420, 1
  %vm2440 = vcmp.lt.s32.totalorder %v2420, 2
  %vm2441 = vcmp.lt.s32.totalorder %v2420, 3
  %vm2442 = vcmp.lt.s32.totalorder %v2420, 4
  %v2443 = vsel %vm2439, %v2423, %v2426
  %v2444 = vsel %vm2442, %v2432, 2102212464
  %v2445 = vsel %vm2441, %v2429, %v2444
  %v2446 = vsel %vm2440, %v2443, %v2445
  %v2447 = vsel %vm2439, %v2426, %v2429
  %v2448 = vsel %vm2442, %v2435, 920167782
  %v2449 = vsel %vm2441, %v2432, %v2448
  %v2450 = vsel %vm2440, %v2447, %v2449
  %v2451 = vsel %vm2439, %v2429, %v2432
  %v2452 = vsel %vm2442, %v2438, 1326507024
  %v2453 = vsel %vm2441, %v2435, %v2452
  %v2454 = vsel %vm2440, %v2451, %v2453
  %v2455 = vshll.u32 %v2415, 8
  %v2456 = vmul.u32.u64.compose %v2455, %v2454
  %v2457 = vextract.low.u32 %v2456
  %v2458 = vextract.high.u32 %v2456
  %v2459 = vmul.u32.u64.compose %v2455, %v2450
  %v2460 = vextract.low.u32 %v2459
  %v2461 = vextract.high.u32 %v2459
  %v2462 = vmul.u32 %v2455, %v2446
  %v2463 = vadd.s32 %v2458, %v2460
  %vm2464 = vc.u32 %v2458, %v2460
  %v2465 = vadd.s32 %v2461, 1
  %v2466 = vsel %vm2464, %v2465, %v2461
  %v2467 = vadd.s32 %v2462, %v2466
  %v2468 = vadd.s32 %v2467, 536870912
  %v2469 = vshrl.u32 %v2468, 30
  %v2470 = vshll.u32 %v2469, 30
  %v2471 = vsub.s32 %v2467, %v2470
  %vm2472 = vcmp.lt.s32.totalorder %v2471, 0
  %v2473 = vsub.s32 0, %v2471
  %v2474 = vsel %vm2472, %v2473, %v2471
  %v2475 = vclz %v2474
  %v2476 = vsub.s32 %v2475, 2
  %vm2477 = vcmp.gt.s32.totalorder 0, %v2476
  %v2478 = vsel %vm2477, 0, %v2476
  %v2479 = vsub.s32 32, %v2478
  %v2480 = vshll.u32 %v2471, %v2478
  %v2481 = vshrl.u32 %v2463, %v2479
  %v2482 = vor.u32 %v2480, %v2481
  %v2483 = vsub.s32 4294967266, %v2478
  %v2484 = vadd.s32 %v2483, 127
  %v2485 = vshll.u32 %v2484, 23
  %v2486 = vor.u32 4788187, %v2485
  %v2487 = vand.u32 2147483647, %v2486
  %v2489 = vcvt.s32.f32 %v2482
  %v2490 = vmul.f32 %v2489, %v2487
  %v2491 = vxor.u32 %v2490, 2147483648
  %v2492 = vsel %vm2409, %v2491, %v2490
  %v2493 = vsub.s32 4, %v2469
  %v2494 = vsel %vm2409, %v2493, %v2469
  %v2495 = vsel %vm2408, %v1475, %v2492
  %v2496 = vsel %vm2408, 0, %v2494
  %v2497 = vcosq.f32.pop %v2495
  %v2498 = vsinq.f32.pop %v2495
  %vm2499 = vweird.f32 %v1475
  %v2500 = vand.u32 %v2496, 3
  %vm2501 = vcmp.lt.s32.totalorder %v2500, 2
  %vm2502 = vcmp.eq.s32.totalorder %v2500, 0
  %v2503 = vxor.u32 %v2498, 2147483648
  %v2504 = vsel %vm2502, %v2497, %v2503
  %vm2505 = vcmp.eq.s32.totalorder %v2500, 2
  %v2506 = vxor.u32 %v2497, 2147483648
  %v2507 = vsel %vm2505, %v2506, %v2498
  %v2508 = vsel %vm2501, %v2504, %v2507
  %v2509 = vsel %vm2499, nan, %v2508
  %v2510 = vand.u32 2147483647, %v1474
  %vm2511 = vcmp.le.f32.partialorder %v2510, 0.7853982
  %vm2512 = vcmp.lt.s32.totalorder %v1474, 0
  %v2513 = vand.u32 %v1474, 2139095040
  %v2514 = vshrl.u32 %v2513, 23
  %v2515 = vsub.s32 %v2514, 127
  %v2516 = vand.u32 2147483647, %v1474
  %v2517 = vand.u32 %v2516, 8388607
  %v2518 = vor.u32 %v2517, 8388608
  %v2519 = vsub.s32 0, %v2518
  %v2520 = vadd.s32 %v2515, 1
  %vm2521 = vcmp.gt.s32.totalorder %v2520, 0
  %v2522 = vsel %vm2521, %v2520, 0
  %v2523 = vshrl.u32 %v2522, 5
  %v2524 = vand.u32 %v2522, 31
  %v2525 = vsub.s32 32, %v2524
  %v2526 = vshrl.u32 683565275, %v2525
  %v2527 = vshll.u32 683565275, %v2524
  %v2528 = vshrl.u32 2475754826, %v2525
  %v2529 = vor.u32 %v2527, %v2528
  %v2530 = vshll.u32 2475754826, %v2524
  %v2531 = vshrl.u32 2131351028, %v2525
  %v2532 = vor.u32 %v2530, %v2531
  %v2533 = vshll.u32 2131351028, %v2524
  %v2534 = vshrl.u32 2102212464, %v2525
  %v2535 = vor.u32 %v2533, %v2534
  %v2536 = vshll.u32 2102212464, %v2524
  %v2537 = vshrl.u32 920167782, %v2525
  %v2538 = vor.u32 %v2536, %v2537
  %v2539 = vshll.u32 920167782, %v2524
  %v2540 = vshrl.u32 1326507024, %v2525
  %v2541 = vor.u32 %v2539, %v2540
  %vm2542 = vcmp.lt.s32.totalorder %v2523, 1
  %vm2543 = vcmp.lt.s32.totalorder %v2523, 2
  %vm2544 = vcmp.lt.s32.totalorder %v2523, 3
  %vm2545 = vcmp.lt.s32.totalorder %v2523, 4
  %v2546 = vsel %vm2542, %v2526, %v2529
  %v2547 = vsel %vm2545, %v2535, 2102212464
  %v2548 = vsel %vm2544, %v2532, %v2547
  %v2549 = vsel %vm2543, %v2546, %v2548
  %v2550 = vsel %vm2542, %v2529, %v2532
  %v2551 = vsel %vm2545, %v2538, 920167782
  %v2552 = vsel %vm2544, %v2535, %v2551
  %v2553 = vsel %vm2543, %v2550, %v2552
  %v2554 = vsel %vm2542, %v2532, %v2535
  %v2555 = vsel %vm2545, %v2541, 1326507024
  %v2556 = vsel %vm2544, %v2538, %v2555
  %v2557 = vsel %vm2543, %v2554, %v2556
  %v2558 = vshll.u32 %v2518, 8
  %v2559 = vmul.u32.u64.compose %v2558, %v2557
  %v2560 = vextract.low.u32 %v2559
  %v2561 = vextract.high.u32 %v2559
  %v2562 = vmul.u32.u64.compose %v2558, %v2553
  %v2563 = vextract.low.u32 %v2562
  %v2564 = vextract.high.u32 %v2562
  %v2565 = vmul.u32 %v2558, %v2549
  %v2566 = vadd.s32 %v2561, %v2563
  %vm2567 = vc.u32 %v2561, %v2563
  %v2568 = vadd.s32 %v2564, 1
  %v2569 = vsel %vm2567, %v2568, %v2564
  %v2570 = vadd.s32 %v2565, %v2569
  %v2571 = vadd.s32 %v2570, 536870912
  %v2572 = vshrl.u32 %v2571, 30
  %v2573 = vshll.u32 %v2572, 30
  %v2574 = vsub.s32 %v2570, %v2573
  %vm2575 = vcmp.lt.s32.totalorder %v2574, 0
  %v2576 = vsub.s32 0, %v2574
  %v2577 = vsel %vm2575, %v2576, %v2574
  %v2578 = vclz %v2577
  %v2579 = vsub.s32 %v2578, 2
  %vm2580 = vcmp.gt.s32.totalorder 0, %v2579
  %v2581 = vsel %vm2580, 0, %v2579
  %v2582 = vsub.s32 32, %v2581
  %v2583 = vshll.u32 %v2574, %v2581
  %v2584 = vshrl.u32 %v2566, %v2582
  %v2585 = vor.u32 %v2583, %v2584
  %v2586 = vsub.s32 4294967266, %v2581
  %v2587 = vadd.s32 %v2586, 127
  %v2588 = vshll.u32 %v2587, 23
  %v2589 = vor.u32 4788187, %v2588
  %v2590 = vand.u32 2147483647, %v2589
  %v2592 = vcvt.s32.f32 %v2585
  %v2593 = vmul.f32 %v2592, %v2590
  %v2594 = vxor.u32 %v2593, 2147483648
  %v2595 = vsel %vm2512, %v2594, %v2593
  %v2596 = vsub.s32 4, %v2572
  %v2597 = vsel %vm2512, %v2596, %v2572
  %v2598 = vsel %vm2511, %v1474, %v2595
  %v2599 = vsel %vm2511, 0, %v2597
  %v2600 = vcosq.f32.pop %v2598
  %v2601 = vsinq.f32.pop %v2598
  %vm2602 = vweird.f32 %v1474
  %v2603 = vadd.s32 %v2599, 3
  %v2604 = vand.u32 %v2603, 3
  %vm2605 = vcmp.lt.s32.totalorder %v2604, 2
  %vm2606 = vcmp.eq.s32.totalorder %v2604, 0
  %v2607 = vxor.u32 %v2601, 2147483648
  %v2608 = vsel %vm2606, %v2600, %v2607
  %vm2609 = vcmp.eq.s32.totalorder %v2604, 2
  %v2610 = vxor.u32 %v2600, 2147483648
  %v2611 = vsel %vm2609, %v2610, %v2601
  %v2612 = vsel %vm2605, %v2608, %v2611
  %v2613 = vsel %vm2602, nan, %v2612
  %v2614 = vand.u32 2147483647, %v1475
  %vm2615 = vcmp.le.f32.partialorder %v2614, 0.7853982
  %vm2616 = vcmp.lt.s32.totalorder %v1475, 0
  %v2617 = vand.u32 %v1475, 2139095040
  %v2618 = vshrl.u32 %v2617, 23
  %v2619 = vsub.s32 %v2618, 127
  %v2620 = vand.u32 2147483647, %v1475
  %v2621 = vand.u32 %v2620, 8388607
  %v2622 = vor.u32 %v2621, 8388608
  %v2623 = vsub.s32 0, %v2622
  %v2624 = vadd.s32 %v2619, 1
  %vm2625 = vcmp.gt.s32.totalorder %v2624, 0
  %v2626 = vsel %vm2625, %v2624, 0
  %v2627 = vshrl.u32 %v2626, 5
  %v2628 = vand.u32 %v2626, 31
  %v2629 = vsub.s32 32, %v2628
  %v2630 = vshrl.u32 683565275, %v2629
  %v2631 = vshll.u32 683565275, %v2628
  %v2632 = vshrl.u32 2475754826, %v2629
  %v2633 = vor.u32 %v2631, %v2632
  %v2634 = vshll.u32 2475754826, %v2628
  %v2635 = vshrl.u32 2131351028, %v2629
  %v2636 = vor.u32 %v2634, %v2635
  %v2637 = vshll.u32 2131351028, %v2628
  %v2638 = vshrl.u32 2102212464, %v2629
  %v2639 = vor.u32 %v2637, %v2638
  %v2640 = vshll.u32 2102212464, %v2628
  %v2641 = vshrl.u32 920167782, %v2629
  %v2642 = vor.u32 %v2640, %v2641
  %v2643 = vshll.u32 920167782, %v2628
  %v2644 = vshrl.u32 1326507024, %v2629
  %v2645 = vor.u32 %v2643, %v2644
  %vm2646 = vcmp.lt.s32.totalorder %v2627, 1
  %vm2647 = vcmp.lt.s32.totalorder %v2627, 2
  %vm2648 = vcmp.lt.s32.totalorder %v2627, 3
  %vm2649 = vcmp.lt.s32.totalorder %v2627, 4
  %v2650 = vsel %vm2646, %v2630, %v2633
  %v2651 = vsel %vm2649, %v2639, 2102212464
  %v2652 = vsel %vm2648, %v2636, %v2651
  %v2653 = vsel %vm2647, %v2650, %v2652
  %v2654 = vsel %vm2646, %v2633, %v2636
  %v2655 = vsel %vm2649, %v2642, 920167782
  %v2656 = vsel %vm2648, %v2639, %v2655
  %v2657 = vsel %vm2647, %v2654, %v2656
  %v2658 = vsel %vm2646, %v2636, %v2639
  %v2659 = vsel %vm2649, %v2645, 1326507024
  %v2660 = vsel %vm2648, %v2642, %v2659
  %v2661 = vsel %vm2647, %v2658, %v2660
  %v2662 = vshll.u32 %v2622, 8
  %v2663 = vmul.u32.u64.compose %v2662, %v2661
  %v2664 = vextract.low.u32 %v2663
  %v2665 = vextract.high.u32 %v2663
  %v2666 = vmul.u32.u64.compose %v2662, %v2657
  %v2667 = vextract.low.u32 %v2666
  %v2668 = vextract.high.u32 %v2666
  %v2669 = vmul.u32 %v2662, %v2653
  %v2670 = vadd.s32 %v2665, %v2667
  %vm2671 = vc.u32 %v2665, %v2667
  %v2672 = vadd.s32 %v2668, 1
  %v2673 = vsel %vm2671, %v2672, %v2668
  %v2674 = vadd.s32 %v2669, %v2673
  %v2675 = vadd.s32 %v2674, 536870912
  %v2676 = vshrl.u32 %v2675, 30
  %v2677 = vshll.u32 %v2676, 30
  %v2678 = vsub.s32 %v2674, %v2677
  %vm2679 = vcmp.lt.s32.totalorder %v2678, 0
  %v2680 = vsub.s32 0, %v2678
  %v2681 = vsel %vm2679, %v2680, %v2678
  %v2682 = vclz %v2681
  %v2683 = vsub.s32 %v2682, 2
  %vm2684 = vcmp.gt.s32.totalorder 0, %v2683
  %v2685 = vsel %vm2684, 0, %v2683
  %v2686 = vsub.s32 32, %v2685
  %v2687 = vshll.u32 %v2678, %v2685
  %v2688 = vshrl.u32 %v2670, %v2686
  %v2689 = vor.u32 %v2687, %v2688
  %v2690 = vsub.s32 4294967266, %v2685
  %v2691 = vadd.s32 %v2690, 127
  %v2692 = vshll.u32 %v2691, 23
  %v2693 = vor.u32 4788187, %v2692
  %v2694 = vand.u32 2147483647, %v2693
  %v2696 = vcvt.s32.f32 %v2689
  %v2697 = vmul.f32 %v2696, %v2694
  %v2698 = vxor.u32 %v2697, 2147483648
  %v2699 = vsel %vm2616, %v2698, %v2697
  %v2700 = vsub.s32 4, %v2676
  %v2701 = vsel %vm2616, %v2700, %v2676
  %v2702 = vsel %vm2615, %v1475, %v2699
  %v2703 = vsel %vm2615, 0, %v2701
  %v2704 = vcosq.f32.pop %v2702
  %v2705 = vsinq.f32.pop %v2702
  %vm2706 = vweird.f32 %v1475
  %v2707 = vadd.s32 %v2703, 3
  %v2708 = vand.u32 %v2707, 3
  %vm2709 = vcmp.lt.s32.totalorder %v2708, 2
  %vm2710 = vcmp.eq.s32.totalorder %v2708, 0
  %v2711 = vxor.u32 %v2705, 2147483648
  %v2712 = vsel %vm2710, %v2704, %v2711
  %vm2713 = vcmp.eq.s32.totalorder %v2708, 2
  %v2714 = vxor.u32 %v2704, 2147483648
  %v2715 = vsel %vm2713, %v2714, %v2705
  %v2716 = vsel %vm2709, %v2712, %v2715
  %v2717 = vsel %vm2706, nan, %v2716
  %v2718 = vadd.f32 %v1578, 1.0
  %v2719 = vadd.f32 %v1681, 1.0
  %v2720 = vmul.f32 %v2718, 0.5
  %v2721 = vmul.f32 %v2719, 0.5
  %v2722 = vsub.f32 1.0, %v1578
  %v2723 = vsub.f32 1.0, %v1681
  %v2724 = vmul.f32 %v2722, 0.5
  %v2725 = vmul.f32 %v2723, 0.5
  %v2726 = vmul.f32 %v1785, 0.5
  %v2727 = vmul.f32 %v1889, 0.5
  %v2728 = vmul.f32 %v1992, %v2406
  %v2729 = vmul.f32 %v2095, %v2509
  %v2730 = vmul.f32 %v2199, %v2613
  %v2731 = vmul.f32 %v2303, %v2717
  %v2732 = vmul.f32 %v2199, %v2406
  %v2733 = vmul.f32 %v2303, %v2509
  %v2734 = vmul.f32 %v1992, %v2613
  %v2735 = vmul.f32 %v2095, %v2717
  %v2736 = vsub.f32 %v2728, %v2730
  %v2737 = vsub.f32 %v2729, %v2731
  %v2738 = vadd.f32 %v2732, %v2734
  %v2739 = vadd.f32 %v2733, %v2735
  %v2740 = vadd.f32 %v2728, %v2730
  %v2741 = vadd.f32 %v2729, %v2731
  %v2742 = vsub.f32 %v2732, %v2734
  %v2743 = vsub.f32 %v2733, %v2735
  %v2744 = vsub.f32 %v1388, %v1386
  %v2745 = vsub.f32 %v1389, %v1387
  %v2746 = vmul.f32 %v2724, %v2744
  %v2747 = vmul.f32 %v2725, %v2745
  %v2748 = vmul.f32 %v2726, 2.0
  %v2749 = vmul.f32 %v2727, 2.0
  %v2750 = vmul.f32 %v2406, %v1416
  %v2751 = vmul.f32 %v2509, %v1417
  %v2752 = vmul.f32 %v2613, %v1426
  %v2753 = vmul.f32 %v2717, %v1427
  %v2754 = vsub.f32 %v2750, %v2752
  %v2755 = vsub.f32 %v2751, %v2753
  %v2756 = vmul.f32 %v2748, %v2754
  %v2757 = vmul.f32 %v2749, %v2755
  %v2758 = vsub.f32 %v2746, %v2756
  %v2759 = vsub.f32 %v2747, %v2757
  %v2760 = vadd.f32 %v1386, %v2758
  %v2761 = vadd.f32 %v1387, %v2759
  %v2762 = vsub.f32 %v1388, %v2758
  %v2763 = vsub.f32 %v1389, %v2759
  %v2764 = vmul.f32 %v2720, %v2736
  %v2765 = vmul.f32 %v2721, %v2737
  %v2766 = vmul.f32 %v2724, %v2740
  %v2767 = vmul.f32 %v2725, %v2741
  %v2768 = vmul.f32 %v2720, %v2738
  %v2769 = vmul.f32 %v2721, %v2739
  %v2770 = vmul.f32 %v2724, %v2742
  %v2771 = vmul.f32 %v2725, %v2743
  %v2772 = vsub.f32 %v2764, %v2766
  %v2773 = vsub.f32 %v2765, %v2767
  %v2774 = vadd.f32 %v2768, %v2770
  %v2775 = vadd.f32 %v2769, %v2771
  %v2776 = vsub.f32 %v2768, %v2770
  %v2777 = vsub.f32 %v2769, %v2771
  %v2778 = vadd.f32 %v2764, %v2766
  %v2779 = vadd.f32 %v2765, %v2767
  %v2780 = vmul.f32 %v2726, %v2744
  %v2781 = vmul.f32 %v2727, %v2745
  %v2782 = vmul.f32 %v2772, %v1416
  %v2783 = vmul.f32 %v2773, %v1417
  %v2784 = vmul.f32 %v2774, %v1426
  %v2785 = vmul.f32 %v2775, %v1427
  %v2786 = vsub.f32 %v2782, %v2784
  %v2787 = vsub.f32 %v2783, %v2785
  %v2788 = vmul.f32 %v2780, %v1992
  %v2789 = vmul.f32 %v2781, %v2095
  %v2790 = vsub.f32 %v2786, %v2788
  %v2791 = vsub.f32 %v2787, %v2789
  %v2792 = vmul.f32 %v2776, %v1416
  %v2793 = vmul.f32 %v2777, %v1417
  %v2794 = vmul.f32 %v2778, %v1426
  %v2795 = vmul.f32 %v2779, %v1427
  %v2796 = vadd.f32 %v2792, %v2794
  %v2797 = vadd.f32 %v2793, %v2795
  %v2798 = vmul.f32 %v2780, %v2199
  %v2799 = vmul.f32 %v2781, %v2303
  %v2800 = vsub.f32 %v2796, %v2798
  %v2801 = vsub.f32 %v2797, %v2799
  %2802 = vst [vmem:[%s4] sm:$0xff] %v2760
  %2803 = vst [vmem:[%s4 + $0x8] sm:$0xff] %v2761
  %2804 = vst [vmem:[%s47] sm:$0xff] %v2762
  %2805 = vst [vmem:[%s47 + $0x8] sm:$0xff] %v2763
  %2806 = vst [vmem:[%s51] sm:$0xff] %v2790
  %2807 = vst [vmem:[%s51 + $0x8] sm:$0xff] %v2791
  %2808 = vst [vmem:[%s55] sm:$0xff] %v2800
  %2809 = vst [vmem:[%s55 + $0x8] sm:$0xff] %v2801
  // Predicated region
  $region14: #{qlayer_chunked_forward.1} parent=0 // pred_check
    _
  $region15: #{qlayer_chunked_forward.1} parent=0 // pred_check_branch
    %2811 = sbr.rel (0) target = $region17
  $region16: #{qlayer_chunked_forward.1} parent=0 // pred_region
    _
  $region17: #{qlayer_chunked_forward.1} parent=0 // pred_fallthru
    _
  // Predicated region
  $region18: #{qlayer_chunked_forward.1} parent=0 // pred_check
    _
  $region19: #{qlayer_chunked_forward.1} parent=0 // pred_check_branch
    %2813 = sbr.rel (0) target = $region21
  $region20: #{qlayer_chunked_forward.1} parent=0 // pred_region
    _
  $region21: #{qlayer_chunked_forward.1} parent=0 // pred_fallthru
    _

</llo_original>
